<compile_context>
chip_gen: v7x
topology: tpu7x:2x2x1
jax: 0.10.0
libtpu: 0.0.40
codegen_flags: <defaults>
</compile_context>

<pallas_src>
import numpy as np
import jax
import jax.numpy as jnp
from jax.experimental import pallas as pl
from jax.experimental.pallas import tpu as pltpu

# static network sizes
C0, C1, C2, C3 = 2, 4, 8, 16          # channels_list = [C0, C1, C2, C3]
L0, L1, L2 = 14, 28, 56               # lengths before each conv layer
DEPTH = 107                           # final Upsample(size=depth)
K12, K3 = 3, 5                        # kernel sizes

F_IN = C3 * L0        # 224  flattened input features  (c*L0 + l)
F_H1 = C2 * L1        # 224  after layer 1 (conv+up), before lane padding
F_H2 = C1 * L2        # 224  after layer 2 (conv+up), before lane padding
F_H = 256             # lane-dense hidden width (two full 128-lane tiles)
F_C3 = C0 * L2        # 112  after final conv (pre-upsample)
F_OUT = C0 * DEPTH    # 214  flattened output features (c*107 + l)


# ----------------------------------------------------------------------------
# Pallas kernel: whole decoder for a block of B samples
# ----------------------------------------------------------------------------
def decoder_kernel(x_ref, w1_ref, b1_ref, w2_ref, b2_ref, w3_ref, b3_ref,
                   u3_ref, o_ref):
    h = x_ref[...]                                                       # (B, 224) bf16

    # layer 1: fused [ConvT(16->8,k3,'same') + Upsample(x2)] as one matmul, then ReLU
    h = jnp.dot(h, w1_ref[...], preferred_element_type=jnp.float32) + b1_ref[...]
    h = jnp.maximum(h, 0.0).astype(jnp.bfloat16)                         # (B, 256)

    # layer 2: fused [ConvT(8->4,k3,'same') + Upsample(x2)], then ReLU
    h = jnp.dot(h, w2_ref[...], preferred_element_type=jnp.float32) + b2_ref[...]
    h = jnp.maximum(h, 0.0).astype(jnp.bfloat16)                         # (B, 256)

    # final ConvT(4->2,k5,'same'); sigmoid BEFORE the nearest upsample (commutes)
    h = jnp.dot(h, w3_ref[...], preferred_element_type=jnp.float32) + b3_ref[...]  # (B,112) f32
    h = pl.reciprocal(1.0 + jnp.exp(-h), approx=True)                    # sigmoid, EUP

    # nearest Upsample(56 -> 107) as a 0/1 selection matmul (values in (0,1), so any
    # MXU operand truncation is <= ~1e-3 abs; covered by the test tolerance).
    o_ref[...] = jnp.dot(h, u3_ref[...],
                         preferred_element_type=jnp.float32).astype(o_ref.dtype)


def _pick_block(n, max_block):
    """Pick the per-step batch B:
       - if N fits in one block, take the full extent (no (8,128) constraint applies);
       - otherwise the largest multiple of 8 <= max_block dividing N, preferring an
         even grid (keeps both v7x TensorCores busy on the last steps) -> no host-side
         pad / [:N] slice HBM passes;
       - fallback (N has no usable divisor): max_block with minimal padding."""
    if n <= max_block:
        return n
    divs = [b for b in range(8, max_block + 1, 8) if n % b == 0]
    if divs:
        even = [b for b in divs if (n // b) % 2 == 0]
        return max(even) if even else max(divs)
    return max_block


def decoder_forward(x, params, block_b=1024):
    """x: (N, 16, 14) f32 -> (N, 2, 107) f32.

    block_b is the per-grid-step batch cap (sweepable).  1024 is safe for v5e's
    16 MiB default scoped VMEM; use 2048-4096 on v6e/v7x for slightly better
    roofline at very large N."""
    N = x.shape[0]
    w1, b1v, w2, b2v, w3, b3v, u3 = params

    # free row-major reshape; bf16 streaming halves input HBM traffic (the cast
    # disappears entirely when the upstream producer already emits bf16).
    x_flat = x.reshape(N, F_IN).astype(jnp.bfloat16)

    max_block = max(8, (int(block_b) // 8) * 8)
    B = _pick_block(N, max_block)
    pad = (-N) % B
    if pad:  # rare fallback only; costs an extra HBM pass over the input
        x_flat = jnp.pad(x_flat, ((0, pad), (0, 0)))
    n_rows = N + pad
    grid = n_rows // B

    def full2d(a):  # small weight, resident across all grid steps
        return pl.BlockSpec(a.shape, lambda n: (0, 0))

    grid_spec = pltpu.PrefetchScalarGridSpec(
        num_scalar_prefetch=0,
        grid=(grid,),                                     # B samples per step
        in_specs=[
            pl.BlockSpec((B, F_IN), lambda n: (n, 0)),
            full2d(w1), full2d(b1v),
            full2d(w2), full2d(b2v),
            full2d(w3), full2d(b3v),
            full2d(u3),
        ],
        out_specs=pl.BlockSpec((B, F_OUT), lambda n: (n, 0)),
    )

    weight_bytes = sum(int(np.prod(p.shape)) * p.dtype.itemsize
                       for p in (w1, b1v, w2, b2v, w3, b3v, u3))
    cost = pl.CostEstimate(
        flops=int(2 * n_rows * (F_IN * F_H + F_H * F_H + F_H * F_C3 + F_C3 * F_OUT)),
        transcendentals=int(n_rows * 2 * F_C3),           # exp + rcp per sample
        bytes_accessed=int(n_rows * (F_IN * 2 + F_OUT * 4) + weight_bytes),
    )

    out_flat = pl.pallas_call(
        decoder_kernel,
        out_shape=jax.ShapeDtypeStruct((n_rows, F_OUT), jnp.float32),
        grid_spec=grid_spec,
        compiler_params=pltpu.CompilerParams(
            dimension_semantics=("parallel",)),
        cost_estimate=cost,
    )(x_flat, w1, b1v, w2, b2v, w3, b3v, u3)

    if pad:
        out_flat = out_flat[:N]
    return out_flat.reshape(N, C0, DEPTH)                 # free reshape to NCL


# ----------------------------------------------------------------------------
# Host-side parameter prep (glue): fold conv-transpose + nearest upsample into
# dense per-layer operators.  Feature index convention everywhere: c*L + l.
# ----------------------------------------------------------------------------
def make_raw_params(key):
    """ConvTranspose1d weights (Cin, Cout, K) + biases, deterministic."""
    ks = jax.random.split(key, 6)
    u = lambda k, s, sc: jax.random.uniform(k, s, jnp.float32, -1.0, 1.0) * sc
    w1, b1 = u(ks[0], (C3, C2, K12), 0.25), u(ks[1], (C2,), 0.1)
    w2, b2 = u(ks[2], (C2, C1, K12), 0.25), u(ks[3], (C1,), 0.1)
    w3, b3 = u(ks[4], (C1, C0, K3), 0.25), u(ks[5], (C0,), 0.1)
    return (w1, b1), (w2, b2), (w3, b3)


def _convT_matrix(w, l_in, pad):
    """Dense (Cin*Lin, Cout*Lout) operator of ConvTranspose1d(stride=1, padding=pad)."""
    w = np.asarray(w, np.float32)
    cin, cout, k = w.shape
    l_out = l_in + k - 1 - 2 * pad
    m = np.zeros((cin * l_in, cout * l_out), np.float32)
    for ci in range(cin):
        for li in range(l_in):
            for kk in range(k):
                lo = li + kk - pad
                if 0 <= lo < l_out:
                    m[ci * l_in + li, np.arange(cout) * l_out + lo] += w[ci, :, kk]
    return m


def _upsample_matrix(c, l_in, l_out):
    """Dense (C*Lin, C*Lout) operator of nn.Upsample(mode='nearest') (PyTorch floor rule)."""
    u = np.zeros((l_in, l_out), np.float32)
    src = (np.arange(l_out) * l_in) // l_out
    u[src, np.arange(l_out)] = 1.0
    return np.kron(np.eye(c, dtype=np.float32), u)


def prep_params(raw):
    (w1, b1), (w2, b2), (w3, b3) = [
        (np.asarray(w, np.float32), np.asarray(b, np.float32)) for w, b in raw]
    W1 = _convT_matrix(w1, L0, 1) @ _upsample_matrix(C2, L0, L1)     # (224, 224)
    W2 = _convT_matrix(w2, L1, 1) @ _upsample_matrix(C1, L1, L2)     # (224, 224)
    W3 = _convT_matrix(w3, L2, 2)                                    # (224, 112)
    U3 = _upsample_matrix(C0, L2, DEPTH)                             # (112, 214)

    # zero-pad hidden width 224 -> 256 so intermediates are two full 128-lane tiles
    W1p = np.zeros((F_IN, F_H), np.float32); W1p[:, :F_H1] = W1
    W2p = np.zeros((F_H, F_H), np.float32);  W2p[:F_H1, :F_H2] = W2
    W3p = np.zeros((F_H, F_C3), np.float32); W3p[:F_H2, :] = W3
    b1v = np.zeros((1, F_H), np.float32); b1v[0, :F_H1] = np.repeat(b1, L1)
    b2v = np.zeros((1, F_H), np.float32); b2v[0, :F_H2] = np.repeat(b2, L2)
    b3v = np.repeat(b3, L2)[None, :].astype(np.float32)              # (1, 112)

    # conv weights streamed as bf16 (MXU operands are bf16 anyway); biases and the
    # exact 0/1 selection matrix stay f32.
    return (jnp.asarray(W1p, jnp.bfloat16), jnp.asarray(b1v, jnp.float32),
            jnp.asarray(W2p, jnp.bfloat16), jnp.asarray(b2v, jnp.float32),
            jnp.asarray(W3p, jnp.bfloat16), jnp.asarray(b3v, jnp.float32),
            jnp.asarray(U3, jnp.float32))


# ----------------------------------------------------------------------------
# Pure numpy reference (independent scatter-form ConvTranspose1d, for verification)
# ----------------------------------------------------------------------------
def ref_forward(x, raw_params):
    x = np.asarray(x, np.float64)
    (w1, b1), (w2, b2), (w3, b3) = [
        (np.asarray(w, np.float64), np.asarray(b, np.float64)) for w, b in raw_params]

    def convT(x, w, b, pad):                       # scatter form of ConvTranspose1d
        N, Cin, L = x.shape
        _, Cout, K = w.shape
        full = np.zeros((N, Cout, L - 1 + K), np.float64)
        for li in range(L):
            for k in range(K):
                full[:, :, li + k] += x[:, :, li] @ w[:, :, k]
        return full[:, :, pad:pad + L] + b[None, :, None]

    def up_nearest(h, l_out):
        src = (np.arange(l_out) * h.shape[-1]) // l_out
        return h[:, :, src]

    h = convT(x, w1, b1, 1); h = up_nearest(h, 2 * h.shape[-1]); h = np.maximum(h, 0.0)
    h = convT(h, w2, b2, 1); h = up_nearest(h, 2 * h.shape[-1]); h = np.maximum(h, 0.0)
    h = convT(h, w3, b3, 2); h = up_nearest(h, DEPTH)
    return 1.0 / (1.0 + np.exp(-h))


# TODO(synk): the linear_layer=True branch (nn.Linear + nn.Unflatten head) is not
# implemented; as written the reference __init__ puts a python list inside
# nn.Sequential for that branch, so that configuration cannot be constructed.

if __name__ == "__main__":
    key = jax.random.PRNGKey(0)
    kx, kp = jax.random.split(key)

    N = 256
    x = jax.random.normal(kx, (N, C3, L0), jnp.float32)   # (N, 16, 14)
    raw = make_raw_params(kp)
    params = prep_params(raw)

    out = jax.block_until_ready(decoder_forward(x, params, block_b=1024))
    assert out.shape == (N, C0, DEPTH) and out.dtype == jnp.float32

    # Tolerance budget: deliberate bf16 streaming of x / conv weights (same rounding
    # the MXU applies at default precision) plus the approx EUP reciprocal in the
    # sigmoid; structural bugs would produce O(0.1-1) errors, so this stays a
    # meaningful check.
    ref = ref_forward(np.asarray(x), raw)
    np.testing.assert_allclose(np.asarray(out), ref, rtol=2.5e-3, atol=2.5e-3)

    print("KERNEL_OK")
</pallas_src>

<mosaic_0001>
module attributes {stable_mosaic.version = 11 : i64} {
  func.func @decoder_kernel(%arg0: i32, %arg1: memref<256x224xbf16, #tpu.memory_space<vmem>>, %arg2: memref<224x256xbf16, #tpu.memory_space<vmem>>, %arg3: memref<1x256xf32, #tpu.memory_space<vmem>>, %arg4: memref<256x256xbf16, #tpu.memory_space<vmem>>, %arg5: memref<1x256xf32, #tpu.memory_space<vmem>>, %arg6: memref<256x112xbf16, #tpu.memory_space<vmem>>, %arg7: memref<1x112xf32, #tpu.memory_space<vmem>>, %arg8: memref<112x214xf32, #tpu.memory_space<vmem>>, %arg9: memref<256x214xf32, #tpu.memory_space<vmem>>) attributes {dimension_semantics = [#tpu.dimension_semantics<parallel>], iteration_bounds = array<i64: 1>, scalar_prefetch = 0 : i64, scratch_operands = 0 : i64, tpu.core_type = #tpu.core_type<tc>, window_params = [{transform_indices = @transform_0, window_bounds = array<i64: 256, 224>}, {pipeline_mode = #tpu.pipeline_mode<synchronous>, transform_indices = @transform_1, window_bounds = array<i64: 224, 256>}, {pipeline_mode = #tpu.pipeline_mode<synchronous>, transform_indices = @transform_2, window_bounds = array<i64: 1, 256>}, {pipeline_mode = #tpu.pipeline_mode<synchronous>, transform_indices = @transform_3, window_bounds = array<i64: 256, 256>}, {pipeline_mode = #tpu.pipeline_mode<synchronous>, transform_indices = @transform_4, window_bounds = array<i64: 1, 256>}, {pipeline_mode = #tpu.pipeline_mode<synchronous>, transform_indices = @transform_5, window_bounds = array<i64: 256, 112>}, {pipeline_mode = #tpu.pipeline_mode<synchronous>, transform_indices = @transform_6, window_bounds = array<i64: 1, 112>}, {pipeline_mode = #tpu.pipeline_mode<synchronous>, transform_indices = @transform_7, window_bounds = array<i64: 112, 214>}, {transform_indices = @transform_8, window_bounds = array<i64: 256, 214>}]} {
    %c0 = arith.constant 0 : index
    %c0_0 = arith.constant 0 : index
    %0 = vector.load %arg1[%c0, %c0_0] : memref<256x224xbf16, #tpu.memory_space<vmem>>, vector<256x224xbf16>
    %c0_1 = arith.constant 0 : index
    %c0_2 = arith.constant 0 : index
    %1 = vector.load %arg2[%c0_1, %c0_2] : memref<224x256xbf16, #tpu.memory_space<vmem>>, vector<224x256xbf16>
    %cst = arith.constant dense<0.000000e+00> : vector<256x256xf32>
    %2 = tpu.matmul %0, %1, %cst {dimension_numbers = #tpu.dot_dimension_numbers<[1], [0], [0], [1], [0, 0, 1, 1], [], []>} : vector<256x224xbf16>, vector<224x256xbf16>, vector<256x256xf32> -> vector<256x256xf32>
    %c0_3 = arith.constant 0 : index
    %c0_4 = arith.constant 0 : index
    %3 = vector.load %arg3[%c0_3, %c0_4] : memref<1x256xf32, #tpu.memory_space<vmem>>, vector<1x256xf32>
    %4 = vector.broadcast %3 : vector<1x256xf32> to vector<256x256xf32>
    %5 = arith.addf %2, %4 : vector<256x256xf32>
    %cst_5 = arith.constant 0.000000e+00 : f32
    %6 = vector.broadcast %cst_5 : f32 to vector<256x256xf32>
    %7 = arith.maximumf %5, %6 : vector<256x256xf32>
    %8 = arith.truncf %7 : vector<256x256xf32> to vector<256x256xbf16>
    %c0_6 = arith.constant 0 : index
    %c0_7 = arith.constant 0 : index
    %9 = vector.load %arg4[%c0_6, %c0_7] : memref<256x256xbf16, #tpu.memory_space<vmem>>, vector<256x256xbf16>
    %cst_8 = arith.constant dense<0.000000e+00> : vector<256x256xf32>
    %10 = tpu.matmul %8, %9, %cst_8 {dimension_numbers = #tpu.dot_dimension_numbers<[1], [0], [0], [1], [0, 0, 1, 1], [], []>} : vector<256x256xbf16>, vector<256x256xbf16>, vector<256x256xf32> -> vector<256x256xf32>
    %c0_9 = arith.constant 0 : index
    %c0_10 = arith.constant 0 : index
    %11 = vector.load %arg5[%c0_9, %c0_10] : memref<1x256xf32, #tpu.memory_space<vmem>>, vector<1x256xf32>
    %12 = vector.broadcast %11 : vector<1x256xf32> to vector<256x256xf32>
    %13 = arith.addf %10, %12 : vector<256x256xf32>
    %cst_11 = arith.constant 0.000000e+00 : f32
    %14 = vector.broadcast %cst_11 : f32 to vector<256x256xf32>
    %15 = arith.maximumf %13, %14 : vector<256x256xf32>
    %16 = arith.truncf %15 : vector<256x256xf32> to vector<256x256xbf16>
    %c0_12 = arith.constant 0 : index
    %c0_13 = arith.constant 0 : index
    %17 = vector.load %arg6[%c0_12, %c0_13] : memref<256x112xbf16, #tpu.memory_space<vmem>>, vector<256x112xbf16>
    %cst_14 = arith.constant dense<0.000000e+00> : vector<256x112xf32>
    %18 = tpu.matmul %16, %17, %cst_14 {dimension_numbers = #tpu.dot_dimension_numbers<[1], [0], [0], [1], [0, 0, 1, 1], [], []>} : vector<256x256xbf16>, vector<256x112xbf16>, vector<256x112xf32> -> vector<256x112xf32>
    %c0_15 = arith.constant 0 : index
    %c0_16 = arith.constant 0 : index
    %19 = vector.load %arg7[%c0_15, %c0_16] : memref<1x112xf32, #tpu.memory_space<vmem>>, vector<1x112xf32>
    %20 = vector.broadcast %19 : vector<1x112xf32> to vector<256x112xf32>
    %21 = arith.addf %18, %20 : vector<256x112xf32>
    %cst_17 = arith.constant 0.000000e+00 : f32
    %22 = vector.broadcast %cst_17 : f32 to vector<256x112xf32>
    %23 = arith.subf %22, %21 : vector<256x112xf32>
    %24 = math.exp %23 : vector<256x112xf32>
    %cst_18 = arith.constant 1.000000e+00 : f32
    %25 = vector.broadcast %cst_18 : f32 to vector<256x112xf32>
    %26 = arith.addf %25, %24 : vector<256x112xf32>
    %27 = tpu.reciprocal %26 {approx = true} : vector<256x112xf32> -> vector<256x112xf32>
    %c0_19 = arith.constant 0 : index
    %c0_20 = arith.constant 0 : index
    %28 = vector.load %arg8[%c0_19, %c0_20] : memref<112x214xf32, #tpu.memory_space<vmem>>, vector<112x214xf32>
    %cst_21 = arith.constant dense<0.000000e+00> : vector<256x214xf32>
    %29 = tpu.matmul %27, %28, %cst_21 {dimension_numbers = #tpu.dot_dimension_numbers<[1], [0], [0], [1], [0, 0, 1, 1], [], []>} : vector<256x112xf32>, vector<112x214xf32>, vector<256x214xf32> -> vector<256x214xf32>
    %c0_22 = arith.constant 0 : index
    %c0_23 = arith.constant 0 : index
    %30 = vector.load %arg9[%c0_22, %c0_23] : memref<256x214xf32, #tpu.memory_space<vmem>>, vector<256x214xf32>
    tpu.vector_store %arg9[%c0_22, %c0_23], %29 {strides = array<i32>} : memref<256x214xf32, #tpu.memory_space<vmem>>, vector<256x214xf32>,
    return
  }
  func.func @transform_0(%arg0: i32) -> (i32, i32) {
    %c0_i32 = arith.constant 0 : i32
    %c0_i32_0 = arith.constant 0 : i32
    return %arg0, %c0_i32 : i32, i32
  }
  func.func @transform_1(%arg0: i32) -> (i32, i32) {
    %c0_i32 = arith.constant 0 : i32
    %c0_i32_0 = arith.constant 0 : i32
    %c0_i32_1 = arith.constant 0 : i32
    return %c0_i32, %c0_i32_0 : i32, i32
  }
  func.func @transform_2(%arg0: i32) -> (i32, i32) {
    %c0_i32 = arith.constant 0 : i32
    %c0_i32_0 = arith.constant 0 : i32
    %c0_i32_1 = arith.constant 0 : i32
    return %c0_i32, %c0_i32_0 : i32, i32
  }
  func.func @transform_3(%arg0: i32) -> (i32, i32) {
    %c0_i32 = arith.constant 0 : i32
    %c0_i32_0 = arith.constant 0 : i32
    %c0_i32_1 = arith.constant 0 : i32
    return %c0_i32, %c0_i32_0 : i32, i32
  }
  func.func @transform_4(%arg0: i32) -> (i32, i32) {
    %c0_i32 = arith.constant 0 : i32
    %c0_i32_0 = arith.constant 0 : i32
    %c0_i32_1 = arith.constant 0 : i32
    return %c0_i32, %c0_i32_0 : i32, i32
  }
  func.func @transform_5(%arg0: i32) -> (i32, i32) {
    %c0_i32 = arith.constant 0 : i32
    %c0_i32_0 = arith.constant 0 : i32
    %c0_i32_1 = arith.constant 0 : i32
    return %c0_i32, %c0_i32_0 : i32, i32
  }
  func.func @transform_6(%arg0: i32) -> (i32, i32) {
    %c0_i32 = arith.constant 0 : i32
    %c0_i32_0 = arith.constant 0 : i32
    %c0_i32_1 = arith.constant 0 : i32
    return %c0_i32, %c0_i32_0 : i32, i32
  }
  func.func @transform_7(%arg0: i32) -> (i32, i32) {
    %c0_i32 = arith.constant 0 : i32
    %c0_i32_0 = arith.constant 0 : i32
    %c0_i32_1 = arith.constant 0 : i32
    return %c0_i32, %c0_i32_0 : i32, i32
  }
  func.func @transform_8(%arg0: i32) -> (i32, i32) {
    %c0_i32 = arith.constant 0 : i32
    %c0_i32_0 = arith.constant 0 : i32
    return %arg0, %c0_i32 : i32, i32
  }
}

</mosaic_0001>

<llo_original>
// kernel: tpu_custom_call.1
$region0: #{tpu_custom_call.1}
  #allocation0 [shape = 'u32[]', space=smem, size = 0x4, offset = 0x4, fixed_abs, tag = 'smem constant byte address 0x4 - core index']
  #allocation1 [shape = 'u32[144,128]{1,0:T(1,128)}', space=vmem, size = 0x12000, scoped, tag = 'internal scratch']
  %s0 = inlined_call_operand.vmem [shape: bf16[256,224], index: 0, kind: input, shape index: {}]
  %s1 = inlined_call_operand.vmem [shape: bf16[224,256], index: 1, kind: input, shape index: {}]
  %s2 = inlined_call_operand.vmem [shape: f32[1,256], index: 2, kind: input, shape index: {}]
  %s3 = inlined_call_operand.vmem [shape: bf16[256,256], index: 3, kind: input, shape index: {}]
  %s4 = inlined_call_operand.vmem [shape: f32[1,256], index: 4, kind: input, shape index: {}]
  %s5 = inlined_call_operand.vmem [shape: bf16[256,112], index: 5, kind: input, shape index: {}]
  %s6 = inlined_call_operand.vmem [shape: f32[1,112], index: 6, kind: input, shape index: {}]
  %s7 = inlined_call_operand.vmem [shape: f32[112,214], index: 7, kind: input, shape index: {}]
  %s8 = inlined_call_operand.vmem [shape: f32[256,214], index: 8, kind: output, shape index: {}]
  %s9 = sld [smem:[#allocation0]]
  $region42: #{tpu_custom_call.1} parent=0
    _
  %s11 = ssub.s32 1, %s9
  %s12 = scalar_select 0, %s11, %s9
  // Predicated region
  $region2: #{tpu_custom_call.1} parent=0 // pred_check
    _
  $region3: #{tpu_custom_call.1} parent=0 // pred_check_branch
    %14 = sbr.rel (0) target = $region5
  $region4: #{tpu_custom_call.1} parent=0 // pred_region
    _
  $region5: #{tpu_custom_call.1} parent=0 // pred_fallthru
    _
  // Predicated region
  $region6: #{tpu_custom_call.1} parent=0 // pred_check
    _
  $region7: #{tpu_custom_call.1} parent=0 // pred_check_branch
    %16 = sbr.rel (0) target = $region9
  $region8: #{tpu_custom_call.1} parent=0 // pred_region
    _
  $region9: #{tpu_custom_call.1} parent=0 // pred_fallthru
    _
  // Predicated region
  $region10: #{tpu_custom_call.1} parent=0 // pred_check
    _
  $region11: #{tpu_custom_call.1} parent=0 // pred_check_branch
    %18 = sbr.rel (0) target = $region13
  $region12: #{tpu_custom_call.1} parent=0 // pred_region
    _
  $region13: #{tpu_custom_call.1} parent=0 // pred_fallthru
    _
  // Predicated region
  $region14: #{tpu_custom_call.1} parent=0 // pred_check
    _
  $region15: #{tpu_custom_call.1} parent=0 // pred_check_branch
    %20 = sbr.rel (0) target = $region17
  $region16: #{tpu_custom_call.1} parent=0 // pred_region
    _
  $region17: #{tpu_custom_call.1} parent=0 // pred_fallthru
    _
  // Predicated region
  $region18: #{tpu_custom_call.1} parent=0 // pred_check
    _
  $region19: #{tpu_custom_call.1} parent=0 // pred_check_branch
    %22 = sbr.rel (0) target = $region21
  $region20: #{tpu_custom_call.1} parent=0 // pred_region
    _
  $region21: #{tpu_custom_call.1} parent=0 // pred_fallthru
    _
  // Predicated region
  $region22: #{tpu_custom_call.1} parent=0 // pred_check
    _
  $region23: #{tpu_custom_call.1} parent=0 // pred_check_branch
    %24 = sbr.rel (0) target = $region25
  $region24: #{tpu_custom_call.1} parent=0 // pred_region
    _
  $region25: #{tpu_custom_call.1} parent=0 // pred_fallthru
    _
  // Predicated region
  $region26: #{tpu_custom_call.1} parent=0 // pred_check
    _
  $region27: #{tpu_custom_call.1} parent=0 // pred_check_branch
    %26 = sbr.rel (0) target = $region29
  $region28: #{tpu_custom_call.1} parent=0 // pred_region
    _
  $region29: #{tpu_custom_call.1} parent=0 // pred_fallthru
    _
  // Predicated region
  $region30: #{tpu_custom_call.1} parent=0 // pred_check
    _
  $region31: #{tpu_custom_call.1} parent=0 // pred_check_branch
    %28 = sbr.rel (0) target = $region33
  $region32: #{tpu_custom_call.1} parent=0 // pred_region
    _
  $region33: #{tpu_custom_call.1} parent=0 // pred_fallthru
    _
  %v30 = vld [vmem:[%s0] sm:$0xff]
  %v31 = vld [vmem:[%s0 + $0x8] sm:$0xff]
  %v32 = vld [vmem:[%s0 + $0x10] sm:$0xff]
  %v33 = vld [vmem:[%s0 + $0x18] sm:$0xff]
  %v34 = vld [vmem:[%s0 + $0x20] sm:$0xff]
  %v35 = vld [vmem:[%s0 + $0x28] sm:$0xff]
  %v36 = vld [vmem:[%s0 + $0x30] sm:$0xff]
  %v37 = vld [vmem:[%s0 + $0x38] sm:$0xff]
  %v38 = vld [vmem:[%s0 + $0x40] sm:$0xff]
  %v39 = vld [vmem:[%s0 + $0x48] sm:$0xff]
  %v40 = vld [vmem:[%s0 + $0x50] sm:$0xff]
  %v41 = vld [vmem:[%s0 + $0x58] sm:$0xff]
  %v42 = vld [vmem:[%s0 + $0x60] sm:$0xff]
  %v43 = vld [vmem:[%s0 + $0x68] sm:$0xff]
  %v44 = vld [vmem:[%s0 + $0x70] sm:$0xff]
  %v45 = vld [vmem:[%s0 + $0x78] sm:$0xff]
  %v46 = vld [vmem:[%s0 + $0x80] sm:$0xff]
  %v47 = vld [vmem:[%s0 + $0x88] sm:$0xff]
  %v48 = vld [vmem:[%s0 + $0x90] sm:$0xff]
  %v49 = vld [vmem:[%s0 + $0x98] sm:$0xff]
  %v50 = vld [vmem:[%s0 + $0xa0] sm:$0xff]
  %v51 = vld [vmem:[%s0 + $0xa8] sm:$0xff]
  %v52 = vld [vmem:[%s0 + $0xb0] sm:$0xff]
  %v53 = vld [vmem:[%s0 + $0xb8] sm:$0xff]
  %v54 = vld [vmem:[%s0 + $0xc0] sm:$0xff]
  %v55 = vld [vmem:[%s0 + $0xc8] sm:$0xff]
  %v56 = vld [vmem:[%s0 + $0xd0] sm:$0xff]
  %v57 = vld [vmem:[%s0 + $0xd8] sm:$0xff]
  %v58 = vld [vmem:[%s0 + $0xe0] sm:$0xff]
  %v59 = vld [vmem:[%s0 + $0xe8] sm:$0xff]
  %v60 = vld [vmem:[%s0 + $0xf0] sm:$0xff]
  %v61 = vld [vmem:[%s0 + $0xf8] sm:$0xff]
  %v62 = vld [vmem:[%s1] sm:$0xff]
  %v63 = vld [vmem:[%s1 + $0x8] sm:$0xff]
  %v64 = vld [vmem:[%s1 + $0x10] sm:$0xff]
  %v65 = vld [vmem:[%s1 + $0x18] sm:$0xff]
  %v66 = vld [vmem:[%s1 + $0x20] sm:$0xff]
  %v67 = vld [vmem:[%s1 + $0x28] sm:$0xff]
  %v68 = vld [vmem:[%s1 + $0x30] sm:$0xff]
  %v69 = vld [vmem:[%s1 + $0x38] sm:$0xff]
  %v70 = vld [vmem:[%s1 + $0x40] sm:$0xff]
  %v71 = vld [vmem:[%s1 + $0x48] sm:$0xff]
  %v72 = vld [vmem:[%s1 + $0x50] sm:$0xff]
  %v73 = vld [vmem:[%s1 + $0x58] sm:$0xff]
  %v74 = vld [vmem:[%s1 + $0x60] sm:$0xff]
  %v75 = vld [vmem:[%s1 + $0x68] sm:$0xff]
  %v76 = vld [vmem:[%s1 + $0x70] sm:$0xff]
  %v77 = vld [vmem:[%s1 + $0x78] sm:$0xff]
  %v78 = vld [vmem:[%s1 + $0x80] sm:$0xff]
  %v79 = vld [vmem:[%s1 + $0x88] sm:$0xff]
  %v80 = vld [vmem:[%s1 + $0x90] sm:$0xff]
  %v81 = vld [vmem:[%s1 + $0x98] sm:$0xff]
  %v82 = vld [vmem:[%s1 + $0xa0] sm:$0xff]
  %v83 = vld [vmem:[%s1 + $0xa8] sm:$0xff]
  %v84 = vld [vmem:[%s1 + $0xb0] sm:$0xff]
  %v85 = vld [vmem:[%s1 + $0xb8] sm:$0xff]
  %v86 = vld [vmem:[%s1 + $0xc0] sm:$0xff]
  %v87 = vld [vmem:[%s1 + $0xc8] sm:$0xff]
  %v88 = vld [vmem:[%s1 + $0xd0] sm:$0xff]
  %v89 = vld [vmem:[%s1 + $0xd8] sm:$0xff]
  %v90 = vld [vmem:[%s2] sm:$0x3]
  %v92 = vlaneseq
  %v93 = vshrl.u32 %v92, 7
  %v94 = vsub.s32 0, %v93
  %v95 = vrot.slane %v90, %v94
  %v96 = vlaneseq
  %v97 = vshrl.u32 %v96, 7
  %v98 = vsub.s32 1, %v97
  %v99 = vrot.slane %v90, %v98
  %v134 = vunpack.c.l.b16 %v30
  %v135 = vunpack.c.h.b16 %v30
  %v136 = vunpack.c.l.b16 %v31
  %v137 = vunpack.c.h.b16 %v31
  %v138 = vunpack.c.l.b16 %v32
  %v139 = vunpack.c.h.b16 %v32
  %v140 = vunpack.c.l.b16 %v33
  %v141 = vunpack.c.h.b16 %v33
  %v142 = vunpack.c.l.b16 %v34
  %v143 = vunpack.c.h.b16 %v34
  %v144 = vunpack.c.l.b16 %v35
  %v145 = vunpack.c.h.b16 %v35
  %v146 = vunpack.c.l.b16 %v36
  %v147 = vunpack.c.h.b16 %v36
  %v148 = vunpack.c.l.b16 %v37
  %v149 = vunpack.c.h.b16 %v37
  %v150 = vunpack.c.l.b16 %v38
  %v151 = vunpack.c.h.b16 %v38
  %v152 = vunpack.c.l.b16 %v39
  %v153 = vunpack.c.h.b16 %v39
  %v154 = vunpack.c.l.b16 %v40
  %v155 = vunpack.c.h.b16 %v40
  %v156 = vunpack.c.l.b16 %v41
  %v157 = vunpack.c.h.b16 %v41
  %v158 = vunpack.c.l.b16 %v42
  %v159 = vunpack.c.h.b16 %v42
  %v160 = vunpack.c.l.b16 %v43
  %v161 = vunpack.c.h.b16 %v43
  %v162 = vunpack.c.l.b16 %v44
  %v163 = vunpack.c.h.b16 %v44
  %v164 = vunpack.c.l.b16 %v45
  %v165 = vunpack.c.h.b16 %v45
  %v166 = vunpack.c.l.b16 %v46
  %v167 = vunpack.c.h.b16 %v46
  %v168 = vunpack.c.l.b16 %v47
  %v169 = vunpack.c.h.b16 %v47
  %v170 = vunpack.c.l.b16 %v48
  %v171 = vunpack.c.h.b16 %v48
  %v172 = vunpack.c.l.b16 %v49
  %v173 = vunpack.c.h.b16 %v49
  %v174 = vunpack.c.l.b16 %v50
  %v175 = vunpack.c.h.b16 %v50
  %v176 = vunpack.c.l.b16 %v51
  %v177 = vunpack.c.h.b16 %v51
  %v178 = vunpack.c.l.b16 %v52
  %v179 = vunpack.c.h.b16 %v52
  %v180 = vunpack.c.l.b16 %v53
  %v181 = vunpack.c.h.b16 %v53
  %v182 = vunpack.c.l.b16 %v54
  %v183 = vunpack.c.h.b16 %v54
  %v184 = vunpack.c.l.b16 %v55
  %v185 = vunpack.c.h.b16 %v55
  %v186 = vunpack.c.l.b16 %v56
  %v187 = vunpack.c.h.b16 %v56
  %v188 = vunpack.c.l.b16 %v57
  %v189 = vunpack.c.h.b16 %v57
  %v190 = vunpack.c.l.b16 %v58
  %v191 = vunpack.c.h.b16 %v58
  %v192 = vunpack.c.l.b16 %v59
  %v193 = vunpack.c.h.b16 %v59
  %v194 = vunpack.c.l.b16 %v60
  %v195 = vunpack.c.h.b16 %v60
  %v196 = vunpack.c.l.b16 %v61
  %v197 = vunpack.c.h.b16 %v61
  %v198 = vpack.c.b16 %v136, %v134
  %v199 = vpack.c.b16 %v137, %v135
  %v200 = vpack.c.b16 %v140, %v138
  %v201 = vpack.c.b16 %v141, %v139
  %v202 = vpack.c.b16 %v144, %v142
  %v203 = vpack.c.b16 %v145, %v143
  %v204 = vpack.c.b16 %v148, %v146
  %v205 = vpack.c.b16 %v149, %v147
  %v206 = vpack.c.b16 %v152, %v150
  %v207 = vpack.c.b16 %v153, %v151
  %v208 = vpack.c.b16 %v156, %v154
  %v209 = vpack.c.b16 %v157, %v155
  %v210 = vpack.c.b16 %v160, %v158
  %v211 = vpack.c.b16 %v161, %v159
  %v212 = vpack.c.b16 %v164, %v162
  %v213 = vpack.c.b16 %v165, %v163
  %v214 = vpack.c.b16 %v168, %v166
  %v215 = vpack.c.b16 %v169, %v167
  %v216 = vpack.c.b16 %v172, %v170
  %v217 = vpack.c.b16 %v173, %v171
  %v218 = vpack.c.b16 %v176, %v174
  %v219 = vpack.c.b16 %v177, %v175
  %v220 = vpack.c.b16 %v180, %v178
  %v221 = vpack.c.b16 %v181, %v179
  %v222 = vpack.c.b16 %v184, %v182
  %v223 = vpack.c.b16 %v185, %v183
  %v224 = vpack.c.b16 %v188, %v186
  %v225 = vpack.c.b16 %v189, %v187
  %v226 = vpack.c.b16 %v192, %v190
  %v227 = vpack.c.b16 %v193, %v191
  %v228 = vpack.c.b16 %v196, %v194
  %v229 = vpack.c.b16 %v197, %v195
  %v274 = vunpack.c.l.b16 %v62
  %v275 = vunpack.c.h.b16 %v62
  %v276 = vunpack.c.l.b16 %v63
  %v277 = vunpack.c.h.b16 %v63
  %v278 = vunpack.c.l.b16 %v64
  %v279 = vunpack.c.h.b16 %v64
  %v280 = vunpack.c.l.b16 %v65
  %v281 = vunpack.c.h.b16 %v65
  %v282 = vunpack.c.l.b16 %v66
  %v283 = vunpack.c.h.b16 %v66
  %v284 = vunpack.c.l.b16 %v67
  %v285 = vunpack.c.h.b16 %v67
  %v286 = vunpack.c.l.b16 %v68
  %v287 = vunpack.c.h.b16 %v68
  %v288 = vunpack.c.l.b16 %v69
  %v289 = vunpack.c.h.b16 %v69
  %v290 = vunpack.c.l.b16 %v70
  %v291 = vunpack.c.h.b16 %v70
  %v292 = vunpack.c.l.b16 %v71
  %v293 = vunpack.c.h.b16 %v71
  %v294 = vunpack.c.l.b16 %v72
  %v295 = vunpack.c.h.b16 %v72
  %v296 = vunpack.c.l.b16 %v73
  %v297 = vunpack.c.h.b16 %v73
  %v298 = vunpack.c.l.b16 %v74
  %v299 = vunpack.c.h.b16 %v74
  %v300 = vunpack.c.l.b16 %v75
  %v301 = vunpack.c.h.b16 %v75
  %v302 = vunpack.c.l.b16 %v76
  %v303 = vunpack.c.h.b16 %v76
  %v304 = vunpack.c.l.b16 %v77
  %v305 = vunpack.c.h.b16 %v77
  %v306 = vunpack.c.l.b16 %v78
  %v307 = vunpack.c.h.b16 %v78
  %v308 = vunpack.c.l.b16 %v79
  %v309 = vunpack.c.h.b16 %v79
  %v310 = vunpack.c.l.b16 %v80
  %v311 = vunpack.c.h.b16 %v80
  %v312 = vunpack.c.l.b16 %v81
  %v313 = vunpack.c.h.b16 %v81
  %v314 = vunpack.c.l.b16 %v82
  %v315 = vunpack.c.h.b16 %v82
  %v316 = vunpack.c.l.b16 %v83
  %v317 = vunpack.c.h.b16 %v83
  %v318 = vunpack.c.l.b16 %v84
  %v319 = vunpack.c.h.b16 %v84
  %v320 = vunpack.c.l.b16 %v85
  %v321 = vunpack.c.h.b16 %v85
  %v322 = vunpack.c.l.b16 %v86
  %v323 = vunpack.c.h.b16 %v86
  %v324 = vunpack.c.l.b16 %v87
  %v325 = vunpack.c.h.b16 %v87
  %v326 = vunpack.c.l.b16 %v88
  %v327 = vunpack.c.h.b16 %v88
  %v328 = vunpack.c.l.b16 %v89
  %v329 = vunpack.c.h.b16 %v89
  %v330 = vpack.c.b16 %v276, %v274
  %v331 = vpack.c.b16 %v277, %v275
  %v332 = vpack.c.b16 %v280, %v278
  %v333 = vpack.c.b16 %v281, %v279
  %v334 = vpack.c.b16 %v284, %v282
  %v335 = vpack.c.b16 %v285, %v283
  %v336 = vpack.c.b16 %v288, %v286
  %v337 = vpack.c.b16 %v289, %v287
  %v338 = vpack.c.b16 %v292, %v290
  %v339 = vpack.c.b16 %v293, %v291
  %v340 = vpack.c.b16 %v296, %v294
  %v341 = vpack.c.b16 %v297, %v295
  %v342 = vpack.c.b16 %v300, %v298
  %v343 = vpack.c.b16 %v301, %v299
  %v344 = vpack.c.b16 %v304, %v302
  %v345 = vpack.c.b16 %v305, %v303
  %v346 = vpack.c.b16 %v308, %v306
  %v347 = vpack.c.b16 %v309, %v307
  %v348 = vpack.c.b16 %v312, %v310
  %v349 = vpack.c.b16 %v313, %v311
  %v350 = vpack.c.b16 %v316, %v314
  %v351 = vpack.c.b16 %v317, %v315
  %v352 = vpack.c.b16 %v320, %v318
  %v353 = vpack.c.b16 %v321, %v319
  %v354 = vpack.c.b16 %v324, %v322
  %v355 = vpack.c.b16 %v325, %v323
  %v356 = vpack.c.b16 %v328, %v326
  %v357 = vpack.c.b16 %v329, %v327
  %vm386 = vcmask 785408
  %v388 = vsel %vm386, %v199, 0
  %v391 = vsel %vm386, %v201, 0
  %v394 = vsel %vm386, %v203, 0
  %v397 = vsel %vm386, %v205, 0
  %v400 = vsel %vm386, %v207, 0
  %v403 = vsel %vm386, %v209, 0
  %v406 = vsel %vm386, %v211, 0
  %v409 = vsel %vm386, %v213, 0
  %v412 = vsel %vm386, %v215, 0
  %v415 = vsel %vm386, %v217, 0
  %v418 = vsel %vm386, %v219, 0
  %v421 = vsel %vm386, %v221, 0
  %v424 = vsel %vm386, %v223, 0
  %v427 = vsel %vm386, %v225, 0
  %v430 = vsel %vm386, %v227, 0
  %v433 = vsel %vm386, %v229, 0
  %435 = vmatprep.subr.bf16.mxu0 %v331
  %436 = vmatpush1.bf16.msra.mxu0 %v330
  %437 = vmatprep.subr.bf16.mxu0 %v333
  %438 = vmatpush1.bf16.msra.mxu0 %v332
  %439 = vmatprep.subr.bf16.mxu0 %v335
  %440 = vmatpush1.bf16.msra.mxu0 %v334
  %441 = vmatprep.subr.bf16.mxu0 %v337
  %442 = vmatpush1.bf16.msra.mxu0 %v336
  %443 = vmatprep.subr.bf16.mxu0 %v339
  %444 = vmatpush1.bf16.msra.mxu0 %v338
  %445 = vmatprep.subr.bf16.mxu0 %v341
  %446 = vmatpush1.bf16.msra.mxu0 %v340
  %447 = vmatprep.subr.bf16.mxu0 %v343
  %448 = vmatpush1.bf16.msra.mxu0 %v342
  %449 = vmatprep.subr.bf16.mxu0 %v345
  %450 = vmatpush1.bf16.msra.mxu0 %v344
  %451 = vmatprep.subr.bf16.mxu0 %v347
  %452 = vmatpush1.bf16.msra.mxu0 %v346
  %453 = vmatprep.subr.bf16.mxu0 %v349
  %454 = vmatpush1.bf16.msra.mxu0 %v348
  %455 = vmatprep.subr.bf16.mxu0 %v351
  %456 = vmatpush1.bf16.msra.mxu0 %v350
  %457 = vmatprep.subr.bf16.mxu0 %v353
  %458 = vmatpush1.bf16.msra.mxu0 %v352
  %459 = vmatprep.subr.bf16.mxu0 %v355
  %460 = vmatpush1.bf16.msra.mxu0 %v354
  %461 = vmatprep.subr.bf16.mxu0 %v357
  %462 = vmatpush1.bf16.msra.mxu0 %v356
  %463 = vmatprep.subr.bf16.mxu0 0
  %464 = vmatpush1.bf16.msra.mxu0 0
  %465 = vmatprep.subr.bf16.mxu0 0
  %466 = vmatpush1.bf16.msra.mxu0 0
  %467 = vmatprep.mubr.bf16.mxu0 %v388
  %468 = vmatmul.mubr.bf16.gmra.mrb[0].mxu0 %v198
  %v469 = vpop.f32.mrb[0].mxu0
  %v470 = vadd.f32 %v95, %v469
  %v471 = vpop.f32.mrb[0].mxu0
  %v472 = vadd.f32 %v99, %v471
  %v473 = vpop.f32.mrb[0].mxu0
  %v474 = vadd.f32 %v95, %v473
  %v475 = vpop.f32.mrb[0].mxu0
  %v476 = vadd.f32 %v99, %v475
  %477 = vmatprep.mubr.bf16.mxu0 %v391
  %478 = vmatmul.mubr.bf16.gmra.mrb[0].mxu0 %v200
  %v479 = vpop.f32.mrb[0].mxu0
  %v480 = vadd.f32 %v95, %v479
  %v481 = vpop.f32.mrb[0].mxu0
  %v482 = vadd.f32 %v99, %v481
  %v483 = vpop.f32.mrb[0].mxu0
  %v484 = vadd.f32 %v95, %v483
  %v485 = vpop.f32.mrb[0].mxu0
  %v486 = vadd.f32 %v99, %v485
  %487 = vmatprep.mubr.bf16.mxu0 %v394
  %488 = vmatmul.mubr.bf16.gmra.mrb[0].mxu0 %v202
  %v489 = vpop.f32.mrb[0].mxu0
  %v490 = vadd.f32 %v95, %v489
  %v491 = vpop.f32.mrb[0].mxu0
  %v492 = vadd.f32 %v99, %v491
  %v493 = vpop.f32.mrb[0].mxu0
  %v494 = vadd.f32 %v95, %v493
  %v495 = vpop.f32.mrb[0].mxu0
  %v496 = vadd.f32 %v99, %v495
  %497 = vmatprep.mubr.bf16.mxu0 %v397
  %498 = vmatmul.mubr.bf16.gmra.mrb[0].mxu0 %v204
  %v499 = vpop.f32.mrb[0].mxu0
  %v500 = vadd.f32 %v95, %v499
  %v501 = vpop.f32.mrb[0].mxu0
  %v502 = vadd.f32 %v99, %v501
  %v503 = vpop.f32.mrb[0].mxu0
  %v504 = vadd.f32 %v95, %v503
  %v505 = vpop.f32.mrb[0].mxu0
  %v506 = vadd.f32 %v99, %v505
  %507 = vmatprep.mubr.bf16.mxu0 %v400
  %508 = vmatmul.mubr.bf16.gmra.mrb[0].mxu0 %v206
  %v509 = vpop.f32.mrb[0].mxu0
  %v510 = vadd.f32 %v95, %v509
  %v511 = vpop.f32.mrb[0].mxu0
  %v512 = vadd.f32 %v99, %v511
  %v513 = vpop.f32.mrb[0].mxu0
  %v514 = vadd.f32 %v95, %v513
  %v515 = vpop.f32.mrb[0].mxu0
  %v516 = vadd.f32 %v99, %v515
  %517 = vmatprep.mubr.bf16.mxu0 %v403
  %518 = vmatmul.mubr.bf16.gmra.mrb[0].mxu0 %v208
  %v519 = vpop.f32.mrb[0].mxu0
  %v520 = vadd.f32 %v95, %v519
  %v521 = vpop.f32.mrb[0].mxu0
  %v522 = vadd.f32 %v99, %v521
  %v523 = vpop.f32.mrb[0].mxu0
  %v524 = vadd.f32 %v95, %v523
  %v525 = vpop.f32.mrb[0].mxu0
  %v526 = vadd.f32 %v99, %v525
  %527 = vmatprep.mubr.bf16.mxu0 %v406
  %528 = vmatmul.mubr.bf16.gmra.mrb[0].mxu0 %v210
  %v529 = vpop.f32.mrb[0].mxu0
  %v530 = vadd.f32 %v95, %v529
  %v531 = vpop.f32.mrb[0].mxu0
  %v532 = vadd.f32 %v99, %v531
  %v533 = vpop.f32.mrb[0].mxu0
  %v534 = vadd.f32 %v95, %v533
  %v535 = vpop.f32.mrb[0].mxu0
  %v536 = vadd.f32 %v99, %v535
  %537 = vmatprep.mubr.bf16.mxu0 %v409
  %538 = vmatmul.mubr.bf16.gmra.mrb[0].mxu0 %v212
  %v539 = vpop.f32.mrb[0].mxu0
  %v540 = vadd.f32 %v95, %v539
  %v541 = vpop.f32.mrb[0].mxu0
  %v542 = vadd.f32 %v99, %v541
  %v543 = vpop.f32.mrb[0].mxu0
  %v544 = vadd.f32 %v95, %v543
  %v545 = vpop.f32.mrb[0].mxu0
  %v546 = vadd.f32 %v99, %v545
  %547 = vmatprep.mubr.bf16.mxu0 %v412
  %548 = vmatmul.mubr.bf16.gmra.mrb[0].mxu0 %v214
  %v549 = vpop.f32.mrb[0].mxu0
  %v550 = vadd.f32 %v95, %v549
  %v551 = vpop.f32.mrb[0].mxu0
  %v552 = vadd.f32 %v99, %v551
  %v553 = vpop.f32.mrb[0].mxu0
  %v554 = vadd.f32 %v95, %v553
  %v555 = vpop.f32.mrb[0].mxu0
  %v556 = vadd.f32 %v99, %v555
  %557 = vmatprep.mubr.bf16.mxu0 %v415
  %558 = vmatmul.mubr.bf16.gmra.mrb[0].mxu0 %v216
  %v559 = vpop.f32.mrb[0].mxu0
  %v560 = vadd.f32 %v95, %v559
  %v561 = vpop.f32.mrb[0].mxu0
  %v562 = vadd.f32 %v99, %v561
  %v563 = vpop.f32.mrb[0].mxu0
  %v564 = vadd.f32 %v95, %v563
  %v565 = vpop.f32.mrb[0].mxu0
  %v566 = vadd.f32 %v99, %v565
  %567 = vmatprep.mubr.bf16.mxu0 %v418
  %568 = vmatmul.mubr.bf16.gmra.mrb[0].mxu0 %v218
  %v569 = vpop.f32.mrb[0].mxu0
  %v570 = vadd.f32 %v95, %v569
  %v571 = vpop.f32.mrb[0].mxu0
  %v572 = vadd.f32 %v99, %v571
  %v573 = vpop.f32.mrb[0].mxu0
  %v574 = vadd.f32 %v95, %v573
  %v575 = vpop.f32.mrb[0].mxu0
  %v576 = vadd.f32 %v99, %v575
  %577 = vmatprep.mubr.bf16.mxu0 %v421
  %578 = vmatmul.mubr.bf16.gmra.mrb[0].mxu0 %v220
  %v579 = vpop.f32.mrb[0].mxu0
  %v580 = vadd.f32 %v95, %v579
  %v581 = vpop.f32.mrb[0].mxu0
  %v582 = vadd.f32 %v99, %v581
  %v583 = vpop.f32.mrb[0].mxu0
  %v584 = vadd.f32 %v95, %v583
  %v585 = vpop.f32.mrb[0].mxu0
  %v586 = vadd.f32 %v99, %v585
  %587 = vmatprep.mubr.bf16.mxu0 %v424
  %588 = vmatmul.mubr.bf16.gmra.mrb[0].mxu0 %v222
  %v589 = vpop.f32.mrb[0].mxu0
  %v590 = vadd.f32 %v95, %v589
  %v591 = vpop.f32.mrb[0].mxu0
  %v592 = vadd.f32 %v99, %v591
  %v593 = vpop.f32.mrb[0].mxu0
  %v594 = vadd.f32 %v95, %v593
  %v595 = vpop.f32.mrb[0].mxu0
  %v596 = vadd.f32 %v99, %v595
  %597 = vmatprep.mubr.bf16.mxu0 %v427
  %598 = vmatmul.mubr.bf16.gmra.mrb[0].mxu0 %v224
  %v599 = vpop.f32.mrb[0].mxu0
  %v600 = vadd.f32 %v95, %v599
  %v601 = vpop.f32.mrb[0].mxu0
  %v602 = vadd.f32 %v99, %v601
  %v603 = vpop.f32.mrb[0].mxu0
  %v604 = vadd.f32 %v95, %v603
  %v605 = vpop.f32.mrb[0].mxu0
  %v606 = vadd.f32 %v99, %v605
  %607 = vmatprep.mubr.bf16.mxu0 %v430
  %608 = vmatmul.mubr.bf16.gmra.mrb[0].mxu0 %v226
  %v609 = vpop.f32.mrb[0].mxu0
  %v610 = vadd.f32 %v95, %v609
  %v611 = vpop.f32.mrb[0].mxu0
  %v612 = vadd.f32 %v99, %v611
  %v613 = vpop.f32.mrb[0].mxu0
  %v614 = vadd.f32 %v95, %v613
  %v615 = vpop.f32.mrb[0].mxu0
  %v616 = vadd.f32 %v99, %v615
  %617 = vmatprep.mubr.bf16.mxu0 %v433
  %618 = vmatmul.mubr.bf16.gmra.mrb[0].mxu0 %v228
  %v619 = vpop.f32.mrb[0].mxu0
  %v620 = vadd.f32 %v95, %v619
  %v621 = vpop.f32.mrb[0].mxu0
  %v622 = vadd.f32 %v99, %v621
  %v623 = vpop.f32.mrb[0].mxu0
  %v624 = vadd.f32 %v95, %v623
  %v625 = vpop.f32.mrb[0].mxu0
  %v626 = vadd.f32 %v99, %v625
  %627 = vdwg.mxu0
  %v628 = vmax.f32 %v470, 0.0
  %v629 = vmax.f32 %v472, 0.0
  %v630 = vmax.f32 %v474, 0.0
  %v631 = vmax.f32 %v476, 0.0
  %v632 = vmax.f32 %v480, 0.0
  %v633 = vmax.f32 %v482, 0.0
  %v634 = vmax.f32 %v484, 0.0
  %v635 = vmax.f32 %v486, 0.0
  %v636 = vmax.f32 %v490, 0.0
  %v637 = vmax.f32 %v492, 0.0
  %v638 = vmax.f32 %v494, 0.0
  %v639 = vmax.f32 %v496, 0.0
  %v640 = vmax.f32 %v500, 0.0
  %v641 = vmax.f32 %v502, 0.0
  %v642 = vmax.f32 %v504, 0.0
  %v643 = vmax.f32 %v506, 0.0
  %v644 = vmax.f32 %v510, 0.0
  %v645 = vmax.f32 %v512, 0.0
  %v646 = vmax.f32 %v514, 0.0
  %v647 = vmax.f32 %v516, 0.0
  %v648 = vmax.f32 %v520, 0.0
  %v649 = vmax.f32 %v522, 0.0
  %v650 = vmax.f32 %v524, 0.0
  %v651 = vmax.f32 %v526, 0.0
  %v652 = vmax.f32 %v530, 0.0
  %v653 = vmax.f32 %v532, 0.0
  %v654 = vmax.f32 %v534, 0.0
  %v655 = vmax.f32 %v536, 0.0
  %v656 = vmax.f32 %v540, 0.0
  %v657 = vmax.f32 %v542, 0.0
  %v658 = vmax.f32 %v544, 0.0
  %v659 = vmax.f32 %v546, 0.0
  %v660 = vmax.f32 %v550, 0.0
  %v661 = vmax.f32 %v552, 0.0
  %v662 = vmax.f32 %v554, 0.0
  %v663 = vmax.f32 %v556, 0.0
  %v664 = vmax.f32 %v560, 0.0
  %v665 = vmax.f32 %v562, 0.0
  %v666 = vmax.f32 %v564, 0.0
  %v667 = vmax.f32 %v566, 0.0
  %v668 = vmax.f32 %v570, 0.0
  %v669 = vmax.f32 %v572, 0.0
  %v670 = vmax.f32 %v574, 0.0
  %v671 = vmax.f32 %v576, 0.0
  %v672 = vmax.f32 %v580, 0.0
  %v673 = vmax.f32 %v582, 0.0
  %v674 = vmax.f32 %v584, 0.0
  %v675 = vmax.f32 %v586, 0.0
  %v676 = vmax.f32 %v590, 0.0
  %v677 = vmax.f32 %v592, 0.0
  %v678 = vmax.f32 %v594, 0.0
  %v679 = vmax.f32 %v596, 0.0
  %v680 = vmax.f32 %v600, 0.0
  %v681 = vmax.f32 %v602, 0.0
  %v682 = vmax.f32 %v604, 0.0
  %v683 = vmax.f32 %v606, 0.0
  %v684 = vmax.f32 %v610, 0.0
  %v685 = vmax.f32 %v612, 0.0
  %v686 = vmax.f32 %v614, 0.0
  %v687 = vmax.f32 %v616, 0.0
  %v688 = vmax.f32 %v620, 0.0
  %v689 = vmax.f32 %v622, 0.0
  %v690 = vmax.f32 %v624, 0.0
  %v691 = vmax.f32 %v626, 0.0
  %v692 = vpack.c.bf16 %v630, %v628
  %v693 = vpack.c.bf16 %v631, %v629
  %v694 = vpack.c.bf16 %v634, %v632
  %v695 = vpack.c.bf16 %v635, %v633
  %v696 = vpack.c.bf16 %v638, %v636
  %v697 = vpack.c.bf16 %v639, %v637
  %v698 = vpack.c.bf16 %v642, %v640
  %v699 = vpack.c.bf16 %v643, %v641
  %v700 = vpack.c.bf16 %v646, %v644
  %v701 = vpack.c.bf16 %v647, %v645
  %v702 = vpack.c.bf16 %v650, %v648
  %v703 = vpack.c.bf16 %v651, %v649
  %v704 = vpack.c.bf16 %v654, %v652
  %v705 = vpack.c.bf16 %v655, %v653
  %v706 = vpack.c.bf16 %v658, %v656
  %v707 = vpack.c.bf16 %v659, %v657
  %v708 = vpack.c.bf16 %v662, %v660
  %v709 = vpack.c.bf16 %v663, %v661
  %v710 = vpack.c.bf16 %v666, %v664
  %v711 = vpack.c.bf16 %v667, %v665
  %v712 = vpack.c.bf16 %v670, %v668
  %v713 = vpack.c.bf16 %v671, %v669
  %v714 = vpack.c.bf16 %v674, %v672
  %v715 = vpack.c.bf16 %v675, %v673
  %v716 = vpack.c.bf16 %v678, %v676
  %v717 = vpack.c.bf16 %v679, %v677
  %v718 = vpack.c.bf16 %v682, %v680
  %v719 = vpack.c.bf16 %v683, %v681
  %v720 = vpack.c.bf16 %v686, %v684
  %v721 = vpack.c.bf16 %v687, %v685
  %v722 = vpack.c.bf16 %v690, %v688
  %v723 = vpack.c.bf16 %v691, %v689
  %v724 = vld [vmem:[%s3] sm:$0xff]
  %v725 = vld [vmem:[%s3 + $0x8] sm:$0xff]
  %v726 = vld [vmem:[%s3 + $0x10] sm:$0xff]
  %v727 = vld [vmem:[%s3 + $0x18] sm:$0xff]
  %v728 = vld [vmem:[%s3 + $0x20] sm:$0xff]
  %v729 = vld [vmem:[%s3 + $0x28] sm:$0xff]
  %v730 = vld [vmem:[%s3 + $0x30] sm:$0xff]
  %v731 = vld [vmem:[%s3 + $0x38] sm:$0xff]
  %v732 = vld [vmem:[%s3 + $0x40] sm:$0xff]
  %v733 = vld [vmem:[%s3 + $0x48] sm:$0xff]
  %v734 = vld [vmem:[%s3 + $0x50] sm:$0xff]
  %v735 = vld [vmem:[%s3 + $0x58] sm:$0xff]
  %v736 = vld [vmem:[%s3 + $0x60] sm:$0xff]
  %v737 = vld [vmem:[%s3 + $0x68] sm:$0xff]
  %v738 = vld [vmem:[%s3 + $0x70] sm:$0xff]
  %v739 = vld [vmem:[%s3 + $0x78] sm:$0xff]
  %v740 = vld [vmem:[%s3 + $0x80] sm:$0xff]
  %v741 = vld [vmem:[%s3 + $0x88] sm:$0xff]
  %v742 = vld [vmem:[%s3 + $0x90] sm:$0xff]
  %v743 = vld [vmem:[%s3 + $0x98] sm:$0xff]
  %v744 = vld [vmem:[%s3 + $0xa0] sm:$0xff]
  %v745 = vld [vmem:[%s3 + $0xa8] sm:$0xff]
  %v746 = vld [vmem:[%s3 + $0xb0] sm:$0xff]
  %v747 = vld [vmem:[%s3 + $0xb8] sm:$0xff]
  %v748 = vld [vmem:[%s3 + $0xc0] sm:$0xff]
  %v749 = vld [vmem:[%s3 + $0xc8] sm:$0xff]
  %v750 = vld [vmem:[%s3 + $0xd0] sm:$0xff]
  %v751 = vld [vmem:[%s3 + $0xd8] sm:$0xff]
  %v752 = vld [vmem:[%s3 + $0xe0] sm:$0xff]
  %v753 = vld [vmem:[%s3 + $0xe8] sm:$0xff]
  %v754 = vld [vmem:[%s3 + $0xf0] sm:$0xff]
  %v755 = vld [vmem:[%s3 + $0xf8] sm:$0xff]
  %v756 = vld [vmem:[%s4] sm:$0x3]
  %v758 = vlaneseq
  %v759 = vshrl.u32 %v758, 7
  %v760 = vsub.s32 0, %v759
  %v761 = vrot.slane %v756, %v760
  %v762 = vlaneseq
  %v763 = vshrl.u32 %v762, 7
  %v764 = vsub.s32 1, %v763
  %v765 = vrot.slane %v756, %v764
  %v800 = vunpack.c.l.b16 %v724
  %v801 = vunpack.c.h.b16 %v724
  %v802 = vunpack.c.l.b16 %v725
  %v803 = vunpack.c.h.b16 %v725
  %v804 = vunpack.c.l.b16 %v726
  %v805 = vunpack.c.h.b16 %v726
  %v806 = vunpack.c.l.b16 %v727
  %v807 = vunpack.c.h.b16 %v727
  %v808 = vunpack.c.l.b16 %v728
  %v809 = vunpack.c.h.b16 %v728
  %v810 = vunpack.c.l.b16 %v729
  %v811 = vunpack.c.h.b16 %v729
  %v812 = vunpack.c.l.b16 %v730
  %v813 = vunpack.c.h.b16 %v730
  %v814 = vunpack.c.l.b16 %v731
  %v815 = vunpack.c.h.b16 %v731
  %v816 = vunpack.c.l.b16 %v732
  %v817 = vunpack.c.h.b16 %v732
  %v818 = vunpack.c.l.b16 %v733
  %v819 = vunpack.c.h.b16 %v733
  %v820 = vunpack.c.l.b16 %v734
  %v821 = vunpack.c.h.b16 %v734
  %v822 = vunpack.c.l.b16 %v735
  %v823 = vunpack.c.h.b16 %v735
  %v824 = vunpack.c.l.b16 %v736
  %v825 = vunpack.c.h.b16 %v736
  %v826 = vunpack.c.l.b16 %v737
  %v827 = vunpack.c.h.b16 %v737
  %v828 = vunpack.c.l.b16 %v738
  %v829 = vunpack.c.h.b16 %v738
  %v830 = vunpack.c.l.b16 %v739
  %v831 = vunpack.c.h.b16 %v739
  %v832 = vunpack.c.l.b16 %v740
  %v833 = vunpack.c.h.b16 %v740
  %v834 = vunpack.c.l.b16 %v741
  %v835 = vunpack.c.h.b16 %v741
  %v836 = vunpack.c.l.b16 %v742
  %v837 = vunpack.c.h.b16 %v742
  %v838 = vunpack.c.l.b16 %v743
  %v839 = vunpack.c.h.b16 %v743
  %v840 = vunpack.c.l.b16 %v744
  %v841 = vunpack.c.h.b16 %v744
  %v842 = vunpack.c.l.b16 %v745
  %v843 = vunpack.c.h.b16 %v745
  %v844 = vunpack.c.l.b16 %v746
  %v845 = vunpack.c.h.b16 %v746
  %v846 = vunpack.c.l.b16 %v747
  %v847 = vunpack.c.h.b16 %v747
  %v848 = vunpack.c.l.b16 %v748
  %v849 = vunpack.c.h.b16 %v748
  %v850 = vunpack.c.l.b16 %v749
  %v851 = vunpack.c.h.b16 %v749
  %v852 = vunpack.c.l.b16 %v750
  %v853 = vunpack.c.h.b16 %v750
  %v854 = vunpack.c.l.b16 %v751
  %v855 = vunpack.c.h.b16 %v751
  %v856 = vunpack.c.l.b16 %v752
  %v857 = vunpack.c.h.b16 %v752
  %v858 = vunpack.c.l.b16 %v753
  %v859 = vunpack.c.h.b16 %v753
  %v860 = vunpack.c.l.b16 %v754
  %v861 = vunpack.c.h.b16 %v754
  %v862 = vunpack.c.l.b16 %v755
  %v863 = vunpack.c.h.b16 %v755
  %v864 = vpack.c.b16 %v802, %v800
  %v865 = vpack.c.b16 %v803, %v801
  %v866 = vpack.c.b16 %v806, %v804
  %v867 = vpack.c.b16 %v807, %v805
  %v868 = vpack.c.b16 %v810, %v808
  %v869 = vpack.c.b16 %v811, %v809
  %v870 = vpack.c.b16 %v814, %v812
  %v871 = vpack.c.b16 %v815, %v813
  %v872 = vpack.c.b16 %v818, %v816
  %v873 = vpack.c.b16 %v819, %v817
  %v874 = vpack.c.b16 %v822, %v820
  %v875 = vpack.c.b16 %v823, %v821
  %v876 = vpack.c.b16 %v826, %v824
  %v877 = vpack.c.b16 %v827, %v825
  %v878 = vpack.c.b16 %v830, %v828
  %v879 = vpack.c.b16 %v831, %v829
  %v880 = vpack.c.b16 %v834, %v832
  %v881 = vpack.c.b16 %v835, %v833
  %v882 = vpack.c.b16 %v838, %v836
  %v883 = vpack.c.b16 %v839, %v837
  %v884 = vpack.c.b16 %v842, %v840
  %v885 = vpack.c.b16 %v843, %v841
  %v886 = vpack.c.b16 %v846, %v844
  %v887 = vpack.c.b16 %v847, %v845
  %v888 = vpack.c.b16 %v850, %v848
  %v889 = vpack.c.b16 %v851, %v849
  %v890 = vpack.c.b16 %v854, %v852
  %v891 = vpack.c.b16 %v855, %v853
  %v892 = vpack.c.b16 %v858, %v856
  %v893 = vpack.c.b16 %v859, %v857
  %v894 = vpack.c.b16 %v862, %v860
  %v895 = vpack.c.b16 %v863, %v861
  %928 = vmatprep.subr.bf16.mxu0 %v865
  %929 = vmatpush1.bf16.msra.mxu0 %v864
  %930 = vmatprep.subr.bf16.mxu0 %v867
  %931 = vmatpush1.bf16.msra.mxu0 %v866
  %932 = vmatprep.subr.bf16.mxu0 %v869
  %933 = vmatpush1.bf16.msra.mxu0 %v868
  %934 = vmatprep.subr.bf16.mxu0 %v871
  %935 = vmatpush1.bf16.msra.mxu0 %v870
  %936 = vmatprep.subr.bf16.mxu0 %v873
  %937 = vmatpush1.bf16.msra.mxu0 %v872
  %938 = vmatprep.subr.bf16.mxu0 %v875
  %939 = vmatpush1.bf16.msra.mxu0 %v874
  %940 = vmatprep.subr.bf16.mxu0 %v877
  %941 = vmatpush1.bf16.msra.mxu0 %v876
  %942 = vmatprep.subr.bf16.mxu0 %v879
  %943 = vmatpush1.bf16.msra.mxu0 %v878
  %944 = vmatprep.subr.bf16.mxu0 %v881
  %945 = vmatpush1.bf16.msra.mxu0 %v880
  %946 = vmatprep.subr.bf16.mxu0 %v883
  %947 = vmatpush1.bf16.msra.mxu0 %v882
  %948 = vmatprep.subr.bf16.mxu0 %v885
  %949 = vmatpush1.bf16.msra.mxu0 %v884
  %950 = vmatprep.subr.bf16.mxu0 %v887
  %951 = vmatpush1.bf16.msra.mxu0 %v886
  %952 = vmatprep.subr.bf16.mxu0 %v889
  %953 = vmatpush1.bf16.msra.mxu0 %v888
  %954 = vmatprep.subr.bf16.mxu0 %v891
  %955 = vmatpush1.bf16.msra.mxu0 %v890
  %956 = vmatprep.subr.bf16.mxu0 %v893
  %957 = vmatpush1.bf16.msra.mxu0 %v892
  %958 = vmatprep.subr.bf16.mxu0 %v895
  %959 = vmatpush1.bf16.msra.mxu0 %v894
  %960 = vmatprep.mubr.bf16.mxu0 %v693
  %961 = vmatmul.mubr.bf16.gmra.mrb[0].mxu0 %v692
  %v962 = vpop.f32.mrb[0].mxu0
  %v963 = vadd.f32 %v761, %v962
  %v964 = vpop.f32.mrb[0].mxu0
  %v965 = vadd.f32 %v765, %v964
  %v966 = vpop.f32.mrb[0].mxu0
  %v967 = vadd.f32 %v761, %v966
  %v968 = vpop.f32.mrb[0].mxu0
  %v969 = vadd.f32 %v765, %v968
  %970 = vmatprep.mubr.bf16.mxu0 %v695
  %971 = vmatmul.mubr.bf16.gmra.mrb[0].mxu0 %v694
  %v972 = vpop.f32.mrb[0].mxu0
  %v973 = vadd.f32 %v761, %v972
  %v974 = vpop.f32.mrb[0].mxu0
  %v975 = vadd.f32 %v765, %v974
  %v976 = vpop.f32.mrb[0].mxu0
  %v977 = vadd.f32 %v761, %v976
  %v978 = vpop.f32.mrb[0].mxu0
  %v979 = vadd.f32 %v765, %v978
  %980 = vmatprep.mubr.bf16.mxu0 %v697
  %981 = vmatmul.mubr.bf16.gmra.mrb[0].mxu0 %v696
  %v982 = vpop.f32.mrb[0].mxu0
  %v983 = vadd.f32 %v761, %v982
  %v984 = vpop.f32.mrb[0].mxu0
  %v985 = vadd.f32 %v765, %v984
  %v986 = vpop.f32.mrb[0].mxu0
  %v987 = vadd.f32 %v761, %v986
  %v988 = vpop.f32.mrb[0].mxu0
  %v989 = vadd.f32 %v765, %v988
  %990 = vmatprep.mubr.bf16.mxu0 %v699
  %991 = vmatmul.mubr.bf16.gmra.mrb[0].mxu0 %v698
  %v992 = vpop.f32.mrb[0].mxu0
  %v993 = vadd.f32 %v761, %v992
  %v994 = vpop.f32.mrb[0].mxu0
  %v995 = vadd.f32 %v765, %v994
  %v996 = vpop.f32.mrb[0].mxu0
  %v997 = vadd.f32 %v761, %v996
  %v998 = vpop.f32.mrb[0].mxu0
  %v999 = vadd.f32 %v765, %v998
  %1000 = vmatprep.mubr.bf16.mxu0 %v701
  %1001 = vmatmul.mubr.bf16.gmra.mrb[0].mxu0 %v700
  %v1002 = vpop.f32.mrb[0].mxu0
  %v1003 = vadd.f32 %v761, %v1002
  %v1004 = vpop.f32.mrb[0].mxu0
  %v1005 = vadd.f32 %v765, %v1004
  %v1006 = vpop.f32.mrb[0].mxu0
  %v1007 = vadd.f32 %v761, %v1006
  %v1008 = vpop.f32.mrb[0].mxu0
  %v1009 = vadd.f32 %v765, %v1008
  %1010 = vmatprep.mubr.bf16.mxu0 %v703
  %1011 = vmatmul.mubr.bf16.gmra.mrb[0].mxu0 %v702
  %v1012 = vpop.f32.mrb[0].mxu0
  %v1013 = vadd.f32 %v761, %v1012
  %v1014 = vpop.f32.mrb[0].mxu0
  %v1015 = vadd.f32 %v765, %v1014
  %v1016 = vpop.f32.mrb[0].mxu0
  %v1017 = vadd.f32 %v761, %v1016
  %v1018 = vpop.f32.mrb[0].mxu0
  %v1019 = vadd.f32 %v765, %v1018
  %1020 = vmatprep.mubr.bf16.mxu0 %v705
  %1021 = vmatmul.mubr.bf16.gmra.mrb[0].mxu0 %v704
  %v1022 = vpop.f32.mrb[0].mxu0
  %v1023 = vadd.f32 %v761, %v1022
  %v1024 = vpop.f32.mrb[0].mxu0
  %v1025 = vadd.f32 %v765, %v1024
  %v1026 = vpop.f32.mrb[0].mxu0
  %v1027 = vadd.f32 %v761, %v1026
  %v1028 = vpop.f32.mrb[0].mxu0
  %v1029 = vadd.f32 %v765, %v1028
  %1030 = vmatprep.mubr.bf16.mxu0 %v707
  %1031 = vmatmul.mubr.bf16.gmra.mrb[0].mxu0 %v706
  %v1032 = vpop.f32.mrb[0].mxu0
  %v1033 = vadd.f32 %v761, %v1032
  %v1034 = vpop.f32.mrb[0].mxu0
  %v1035 = vadd.f32 %v765, %v1034
  %v1036 = vpop.f32.mrb[0].mxu0
  %v1037 = vadd.f32 %v761, %v1036
  %v1038 = vpop.f32.mrb[0].mxu0
  %v1039 = vadd.f32 %v765, %v1038
  %1040 = vmatprep.mubr.bf16.mxu0 %v709
  %1041 = vmatmul.mubr.bf16.gmra.mrb[0].mxu0 %v708
  %v1042 = vpop.f32.mrb[0].mxu0
  %v1043 = vadd.f32 %v761, %v1042
  %v1044 = vpop.f32.mrb[0].mxu0
  %v1045 = vadd.f32 %v765, %v1044
  %v1046 = vpop.f32.mrb[0].mxu0
  %v1047 = vadd.f32 %v761, %v1046
  %v1048 = vpop.f32.mrb[0].mxu0
  %v1049 = vadd.f32 %v765, %v1048
  %1050 = vmatprep.mubr.bf16.mxu0 %v711
  %1051 = vmatmul.mubr.bf16.gmra.mrb[0].mxu0 %v710
  %v1052 = vpop.f32.mrb[0].mxu0
  %v1053 = vadd.f32 %v761, %v1052
  %v1054 = vpop.f32.mrb[0].mxu0
  %v1055 = vadd.f32 %v765, %v1054
  %v1056 = vpop.f32.mrb[0].mxu0
  %v1057 = vadd.f32 %v761, %v1056
  %v1058 = vpop.f32.mrb[0].mxu0
  %v1059 = vadd.f32 %v765, %v1058
  %1060 = vmatprep.mubr.bf16.mxu0 %v713
  %1061 = vmatmul.mubr.bf16.gmra.mrb[0].mxu0 %v712
  %v1062 = vpop.f32.mrb[0].mxu0
  %v1063 = vadd.f32 %v761, %v1062
  %v1064 = vpop.f32.mrb[0].mxu0
  %v1065 = vadd.f32 %v765, %v1064
  %v1066 = vpop.f32.mrb[0].mxu0
  %v1067 = vadd.f32 %v761, %v1066
  %v1068 = vpop.f32.mrb[0].mxu0
  %v1069 = vadd.f32 %v765, %v1068
  %1070 = vmatprep.mubr.bf16.mxu0 %v715
  %1071 = vmatmul.mubr.bf16.gmra.mrb[0].mxu0 %v714
  %v1072 = vpop.f32.mrb[0].mxu0
  %v1073 = vadd.f32 %v761, %v1072
  %v1074 = vpop.f32.mrb[0].mxu0
  %v1075 = vadd.f32 %v765, %v1074
  %v1076 = vpop.f32.mrb[0].mxu0
  %v1077 = vadd.f32 %v761, %v1076
  %v1078 = vpop.f32.mrb[0].mxu0
  %v1079 = vadd.f32 %v765, %v1078
  %1080 = vmatprep.mubr.bf16.mxu0 %v717
  %1081 = vmatmul.mubr.bf16.gmra.mrb[0].mxu0 %v716
  %v1082 = vpop.f32.mrb[0].mxu0
  %v1083 = vadd.f32 %v761, %v1082
  %v1084 = vpop.f32.mrb[0].mxu0
  %v1085 = vadd.f32 %v765, %v1084
  %v1086 = vpop.f32.mrb[0].mxu0
  %v1087 = vadd.f32 %v761, %v1086
  %v1088 = vpop.f32.mrb[0].mxu0
  %v1089 = vadd.f32 %v765, %v1088
  %1090 = vmatprep.mubr.bf16.mxu0 %v719
  %1091 = vmatmul.mubr.bf16.gmra.mrb[0].mxu0 %v718
  %v1092 = vpop.f32.mrb[0].mxu0
  %v1093 = vadd.f32 %v761, %v1092
  %v1094 = vpop.f32.mrb[0].mxu0
  %v1095 = vadd.f32 %v765, %v1094
  %v1096 = vpop.f32.mrb[0].mxu0
  %v1097 = vadd.f32 %v761, %v1096
  %v1098 = vpop.f32.mrb[0].mxu0
  %v1099 = vadd.f32 %v765, %v1098
  %1100 = vmatprep.mubr.bf16.mxu0 %v721
  %1101 = vmatmul.mubr.bf16.gmra.mrb[0].mxu0 %v720
  %v1102 = vpop.f32.mrb[0].mxu0
  %v1103 = vadd.f32 %v761, %v1102
  %v1104 = vpop.f32.mrb[0].mxu0
  %v1105 = vadd.f32 %v765, %v1104
  %v1106 = vpop.f32.mrb[0].mxu0
  %v1107 = vadd.f32 %v761, %v1106
  %v1108 = vpop.f32.mrb[0].mxu0
  %v1109 = vadd.f32 %v765, %v1108
  %1110 = vmatprep.mubr.bf16.mxu0 %v723
  %1111 = vmatmul.mubr.bf16.gmra.mrb[0].mxu0 %v722
  %v1112 = vpop.f32.mrb[0].mxu0
  %v1113 = vadd.f32 %v761, %v1112
  %v1114 = vpop.f32.mrb[0].mxu0
  %v1115 = vadd.f32 %v765, %v1114
  %v1116 = vpop.f32.mrb[0].mxu0
  %v1117 = vadd.f32 %v761, %v1116
  %v1118 = vpop.f32.mrb[0].mxu0
  %v1119 = vadd.f32 %v765, %v1118
  %1120 = vdwg.mxu0
  %v1121 = vmax.f32 %v963, 0.0
  %v1122 = vmax.f32 %v965, 0.0
  %v1123 = vmax.f32 %v967, 0.0
  %v1124 = vmax.f32 %v969, 0.0
  %v1125 = vmax.f32 %v973, 0.0
  %v1126 = vmax.f32 %v975, 0.0
  %v1127 = vmax.f32 %v977, 0.0
  %v1128 = vmax.f32 %v979, 0.0
  %v1129 = vmax.f32 %v983, 0.0
  %v1130 = vmax.f32 %v985, 0.0
  %v1131 = vmax.f32 %v987, 0.0
  %v1132 = vmax.f32 %v989, 0.0
  %v1133 = vmax.f32 %v993, 0.0
  %v1134 = vmax.f32 %v995, 0.0
  %v1135 = vmax.f32 %v997, 0.0
  %v1136 = vmax.f32 %v999, 0.0
  %v1137 = vmax.f32 %v1003, 0.0
  %v1138 = vmax.f32 %v1005, 0.0
  %v1139 = vmax.f32 %v1007, 0.0
  %v1140 = vmax.f32 %v1009, 0.0
  %v1141 = vmax.f32 %v1013, 0.0
  %v1142 = vmax.f32 %v1015, 0.0
  %v1143 = vmax.f32 %v1017, 0.0
  %v1144 = vmax.f32 %v1019, 0.0
  %v1145 = vmax.f32 %v1023, 0.0
  %v1146 = vmax.f32 %v1025, 0.0
  %v1147 = vmax.f32 %v1027, 0.0
  %v1148 = vmax.f32 %v1029, 0.0
  %v1149 = vmax.f32 %v1033, 0.0
  %v1150 = vmax.f32 %v1035, 0.0
  %v1151 = vmax.f32 %v1037, 0.0
  %v1152 = vmax.f32 %v1039, 0.0
  %v1153 = vmax.f32 %v1043, 0.0
  %v1154 = vmax.f32 %v1045, 0.0
  %v1155 = vmax.f32 %v1047, 0.0
  %v1156 = vmax.f32 %v1049, 0.0
  %v1157 = vmax.f32 %v1053, 0.0
  %v1158 = vmax.f32 %v1055, 0.0
  %v1159 = vmax.f32 %v1057, 0.0
  %v1160 = vmax.f32 %v1059, 0.0
  %v1161 = vmax.f32 %v1063, 0.0
  %v1162 = vmax.f32 %v1065, 0.0
  %v1163 = vmax.f32 %v1067, 0.0
  %v1164 = vmax.f32 %v1069, 0.0
  %v1165 = vmax.f32 %v1073, 0.0
  %v1166 = vmax.f32 %v1075, 0.0
  %v1167 = vmax.f32 %v1077, 0.0
  %v1168 = vmax.f32 %v1079, 0.0
  %v1169 = vmax.f32 %v1083, 0.0
  %v1170 = vmax.f32 %v1085, 0.0
  %v1171 = vmax.f32 %v1087, 0.0
  %v1172 = vmax.f32 %v1089, 0.0
  %v1173 = vmax.f32 %v1093, 0.0
  %v1174 = vmax.f32 %v1095, 0.0
  %v1175 = vmax.f32 %v1097, 0.0
  %v1176 = vmax.f32 %v1099, 0.0
  %v1177 = vmax.f32 %v1103, 0.0
  %v1178 = vmax.f32 %v1105, 0.0
  %v1179 = vmax.f32 %v1107, 0.0
  %v1180 = vmax.f32 %v1109, 0.0
  %v1181 = vmax.f32 %v1113, 0.0
  %v1182 = vmax.f32 %v1115, 0.0
  %v1183 = vmax.f32 %v1117, 0.0
  %v1184 = vmax.f32 %v1119, 0.0
  %v1185 = vpack.c.bf16 %v1123, %v1121
  %v1186 = vpack.c.bf16 %v1124, %v1122
  %v1187 = vpack.c.bf16 %v1127, %v1125
  %v1188 = vpack.c.bf16 %v1128, %v1126
  %v1189 = vpack.c.bf16 %v1131, %v1129
  %v1190 = vpack.c.bf16 %v1132, %v1130
  %v1191 = vpack.c.bf16 %v1135, %v1133
  %v1192 = vpack.c.bf16 %v1136, %v1134
  %v1193 = vpack.c.bf16 %v1139, %v1137
  %v1194 = vpack.c.bf16 %v1140, %v1138
  %v1195 = vpack.c.bf16 %v1143, %v1141
  %v1196 = vpack.c.bf16 %v1144, %v1142
  %v1197 = vpack.c.bf16 %v1147, %v1145
  %v1198 = vpack.c.bf16 %v1148, %v1146
  %v1199 = vpack.c.bf16 %v1151, %v1149
  %v1200 = vpack.c.bf16 %v1152, %v1150
  %v1201 = vpack.c.bf16 %v1155, %v1153
  %v1202 = vpack.c.bf16 %v1156, %v1154
  %v1203 = vpack.c.bf16 %v1159, %v1157
  %v1204 = vpack.c.bf16 %v1160, %v1158
  %v1205 = vpack.c.bf16 %v1163, %v1161
  %v1206 = vpack.c.bf16 %v1164, %v1162
  %v1207 = vpack.c.bf16 %v1167, %v1165
  %v1208 = vpack.c.bf16 %v1168, %v1166
  %v1209 = vpack.c.bf16 %v1171, %v1169
  %v1210 = vpack.c.bf16 %v1172, %v1170
  %v1211 = vpack.c.bf16 %v1175, %v1173
  %v1212 = vpack.c.bf16 %v1176, %v1174
  %v1213 = vpack.c.bf16 %v1179, %v1177
  %v1214 = vpack.c.bf16 %v1180, %v1178
  %v1215 = vpack.c.bf16 %v1183, %v1181
  %v1216 = vpack.c.bf16 %v1184, %v1182
  %v1217 = vld [vmem:[%s5] sm:$0xf]
  %v1218 = vld [vmem:[%s5 + $0x4] sm:$0xf]
  %v1219 = vld [vmem:[%s5 + $0x8] sm:$0xf]
  %v1220 = vld [vmem:[%s5 + $0xc] sm:$0xf]
  %v1221 = vld [vmem:[%s5 + $0x10] sm:$0xf]
  %v1222 = vld [vmem:[%s5 + $0x14] sm:$0xf]
  %v1223 = vld [vmem:[%s5 + $0x18] sm:$0xf]
  %v1224 = vld [vmem:[%s5 + $0x1c] sm:$0xf]
  %v1225 = vld [vmem:[%s5 + $0x20] sm:$0xf]
  %v1226 = vld [vmem:[%s5 + $0x24] sm:$0xf]
  %v1227 = vld [vmem:[%s5 + $0x28] sm:$0xf]
  %v1228 = vld [vmem:[%s5 + $0x2c] sm:$0xf]
  %v1229 = vld [vmem:[%s5 + $0x30] sm:$0xf]
  %v1230 = vld [vmem:[%s5 + $0x34] sm:$0xf]
  %v1231 = vld [vmem:[%s5 + $0x38] sm:$0xf]
  %v1232 = vld [vmem:[%s5 + $0x3c] sm:$0xf]
  %v1233 = vld [vmem:[%s5 + $0x40] sm:$0xf]
  %v1234 = vld [vmem:[%s5 + $0x44] sm:$0xf]
  %v1235 = vld [vmem:[%s5 + $0x48] sm:$0xf]
  %v1236 = vld [vmem:[%s5 + $0x4c] sm:$0xf]
  %v1237 = vld [vmem:[%s5 + $0x50] sm:$0xf]
  %v1238 = vld [vmem:[%s5 + $0x54] sm:$0xf]
  %v1239 = vld [vmem:[%s5 + $0x58] sm:$0xf]
  %v1240 = vld [vmem:[%s5 + $0x5c] sm:$0xf]
  %v1241 = vld [vmem:[%s5 + $0x60] sm:$0xf]
  %v1242 = vld [vmem:[%s5 + $0x64] sm:$0xf]
  %v1243 = vld [vmem:[%s5 + $0x68] sm:$0xf]
  %v1244 = vld [vmem:[%s5 + $0x6c] sm:$0xf]
  %v1245 = vld [vmem:[%s5 + $0x70] sm:$0xf]
  %v1246 = vld [vmem:[%s5 + $0x74] sm:$0xf]
  %v1247 = vld [vmem:[%s5 + $0x78] sm:$0xf]
  %v1248 = vld [vmem:[%s5 + $0x7c] sm:$0xf]
  %v1249 = vld [vmem:[%s6] sm:$0x1]
  %v1251 = vlaneseq
  %v1252 = vshrl.u32 %v1251, 7
  %v1253 = vsub.s32 0, %v1252
  %v1254 = vrot.slane %v1249, %v1253
  %v1288 = vunpack.c.l.b16 %v1217
  %v1289 = vunpack.c.l.b16 %v1218
  %v1290 = vunpack.c.l.b16 %v1219
  %v1291 = vunpack.c.l.b16 %v1220
  %v1292 = vunpack.c.l.b16 %v1221
  %v1293 = vunpack.c.l.b16 %v1222
  %v1294 = vunpack.c.l.b16 %v1223
  %v1295 = vunpack.c.l.b16 %v1224
  %v1296 = vunpack.c.l.b16 %v1225
  %v1297 = vunpack.c.l.b16 %v1226
  %v1298 = vunpack.c.l.b16 %v1227
  %v1299 = vunpack.c.l.b16 %v1228
  %v1300 = vunpack.c.l.b16 %v1229
  %v1301 = vunpack.c.l.b16 %v1230
  %v1302 = vunpack.c.l.b16 %v1231
  %v1303 = vunpack.c.l.b16 %v1232
  %v1304 = vunpack.c.l.b16 %v1233
  %v1305 = vunpack.c.l.b16 %v1234
  %v1306 = vunpack.c.l.b16 %v1235
  %v1307 = vunpack.c.l.b16 %v1236
  %v1308 = vunpack.c.l.b16 %v1237
  %v1309 = vunpack.c.l.b16 %v1238
  %v1310 = vunpack.c.l.b16 %v1239
  %v1311 = vunpack.c.l.b16 %v1240
  %v1312 = vunpack.c.l.b16 %v1241
  %v1313 = vunpack.c.l.b16 %v1242
  %v1314 = vunpack.c.l.b16 %v1243
  %v1315 = vunpack.c.l.b16 %v1244
  %v1316 = vunpack.c.l.b16 %v1245
  %v1317 = vunpack.c.l.b16 %v1246
  %v1318 = vunpack.c.l.b16 %v1247
  %v1319 = vunpack.c.l.b16 %v1248
  %v1320 = vpack.c.b16 %v1289, %v1288
  %v1321 = vpack.c.b16 %v1291, %v1290
  %v1322 = vpack.c.b16 %v1293, %v1292
  %v1323 = vpack.c.b16 %v1295, %v1294
  %v1324 = vpack.c.b16 %v1297, %v1296
  %v1325 = vpack.c.b16 %v1299, %v1298
  %v1326 = vpack.c.b16 %v1301, %v1300
  %v1327 = vpack.c.b16 %v1303, %v1302
  %v1328 = vpack.c.b16 %v1305, %v1304
  %v1329 = vpack.c.b16 %v1307, %v1306
  %v1330 = vpack.c.b16 %v1309, %v1308
  %v1331 = vpack.c.b16 %v1311, %v1310
  %v1332 = vpack.c.b16 %v1313, %v1312
  %v1333 = vpack.c.b16 %v1315, %v1314
  %v1334 = vpack.c.b16 %v1317, %v1316
  %v1335 = vpack.c.b16 %v1319, %v1318
  %1352 = vmatprep.subr.bf16.mxu0 0
  %1353 = vmatpush1.bf16.msra.mxu0 %v1320
  %1354 = vmatprep.subr.bf16.mxu0 0
  %1355 = vmatpush1.bf16.msra.mxu0 %v1321
  %1356 = vmatprep.subr.bf16.mxu0 0
  %1357 = vmatpush1.bf16.msra.mxu0 %v1322
  %1358 = vmatprep.subr.bf16.mxu0 0
  %1359 = vmatpush1.bf16.msra.mxu0 %v1323
  %1360 = vmatprep.subr.bf16.mxu0 0
  %1361 = vmatpush1.bf16.msra.mxu0 %v1324
  %1362 = vmatprep.subr.bf16.mxu0 0
  %1363 = vmatpush1.bf16.msra.mxu0 %v1325
  %1364 = vmatprep.subr.bf16.mxu0 0
  %1365 = vmatpush1.bf16.msra.mxu0 %v1326
  %1366 = vmatprep.subr.bf16.mxu0 0
  %1367 = vmatpush1.bf16.msra.mxu0 %v1327
  %1368 = vmatprep.subr.bf16.mxu0 0
  %1369 = vmatpush1.bf16.msra.mxu0 %v1328
  %1370 = vmatprep.subr.bf16.mxu0 0
  %1371 = vmatpush1.bf16.msra.mxu0 %v1329
  %1372 = vmatprep.subr.bf16.mxu0 0
  %1373 = vmatpush1.bf16.msra.mxu0 %v1330
  %1374 = vmatprep.subr.bf16.mxu0 0
  %1375 = vmatpush1.bf16.msra.mxu0 %v1331
  %1376 = vmatprep.subr.bf16.mxu0 0
  %1377 = vmatpush1.bf16.msra.mxu0 %v1332
  %1378 = vmatprep.subr.bf16.mxu0 0
  %1379 = vmatpush1.bf16.msra.mxu0 %v1333
  %1380 = vmatprep.subr.bf16.mxu0 0
  %1381 = vmatpush1.bf16.msra.mxu0 %v1334
  %1382 = vmatprep.subr.bf16.mxu0 0
  %1383 = vmatpush1.bf16.msra.mxu0 %v1335
  %1384 = vmatprep.mubr.bf16.mxu0 %v1186
  %1385 = vmatmul.mubr.bf16.gmra.mrb[0].mxu0 %v1185
  %v1386 = vpop.f32.mrb[0].mxu0
  %v1387 = vadd.f32 %v1254, %v1386
  %v1388 = vpop.f32.mrb[0].mxu0
  %v1389 = vpop.f32.mrb[0].mxu0
  %v1390 = vadd.f32 %v1254, %v1389
  %v1391 = vpop.f32.mrb[0].mxu0
  %1392 = vmatprep.mubr.bf16.mxu0 %v1188
  %1393 = vmatmul.mubr.bf16.gmra.mrb[0].mxu0 %v1187
  %v1394 = vpop.f32.mrb[0].mxu0
  %v1395 = vadd.f32 %v1254, %v1394
  %v1396 = vpop.f32.mrb[0].mxu0
  %v1397 = vpop.f32.mrb[0].mxu0
  %v1398 = vadd.f32 %v1254, %v1397
  %v1399 = vpop.f32.mrb[0].mxu0
  %1400 = vmatprep.mubr.bf16.mxu0 %v1190
  %1401 = vmatmul.mubr.bf16.gmra.mrb[0].mxu0 %v1189
  %v1402 = vpop.f32.mrb[0].mxu0
  %v1403 = vadd.f32 %v1254, %v1402
  %v1404 = vpop.f32.mrb[0].mxu0
  %v1405 = vpop.f32.mrb[0].mxu0
  %v1406 = vadd.f32 %v1254, %v1405
  %v1407 = vpop.f32.mrb[0].mxu0
  %1408 = vmatprep.mubr.bf16.mxu0 %v1192
  %1409 = vmatmul.mubr.bf16.gmra.mrb[0].mxu0 %v1191
  %v1410 = vpop.f32.mrb[0].mxu0
  %v1411 = vadd.f32 %v1254, %v1410
  %v1412 = vpop.f32.mrb[0].mxu0
  %v1413 = vpop.f32.mrb[0].mxu0
  %v1414 = vadd.f32 %v1254, %v1413
  %v1415 = vpop.f32.mrb[0].mxu0
  %1416 = vmatprep.mubr.bf16.mxu0 %v1194
  %1417 = vmatmul.mubr.bf16.gmra.mrb[0].mxu0 %v1193
  %v1418 = vpop.f32.mrb[0].mxu0
  %v1419 = vadd.f32 %v1254, %v1418
  %v1420 = vpop.f32.mrb[0].mxu0
  %v1421 = vpop.f32.mrb[0].mxu0
  %v1422 = vadd.f32 %v1254, %v1421
  %v1423 = vpop.f32.mrb[0].mxu0
  %1424 = vmatprep.mubr.bf16.mxu0 %v1196
  %1425 = vmatmul.mubr.bf16.gmra.mrb[0].mxu0 %v1195
  %v1426 = vpop.f32.mrb[0].mxu0
  %v1427 = vadd.f32 %v1254, %v1426
  %v1428 = vpop.f32.mrb[0].mxu0
  %v1429 = vpop.f32.mrb[0].mxu0
  %v1430 = vadd.f32 %v1254, %v1429
  %v1431 = vpop.f32.mrb[0].mxu0
  %1432 = vmatprep.mubr.bf16.mxu0 %v1198
  %1433 = vmatmul.mubr.bf16.gmra.mrb[0].mxu0 %v1197
  %v1434 = vpop.f32.mrb[0].mxu0
  %v1435 = vadd.f32 %v1254, %v1434
  %v1436 = vpop.f32.mrb[0].mxu0
  %v1437 = vpop.f32.mrb[0].mxu0
  %v1438 = vadd.f32 %v1254, %v1437
  %v1439 = vpop.f32.mrb[0].mxu0
  %1440 = vmatprep.mubr.bf16.mxu0 %v1200
  %1441 = vmatmul.mubr.bf16.gmra.mrb[0].mxu0 %v1199
  %v1442 = vpop.f32.mrb[0].mxu0
  %v1443 = vadd.f32 %v1254, %v1442
  %v1444 = vpop.f32.mrb[0].mxu0
  %v1445 = vpop.f32.mrb[0].mxu0
  %v1446 = vadd.f32 %v1254, %v1445
  %v1447 = vpop.f32.mrb[0].mxu0
  %1448 = vmatprep.mubr.bf16.mxu0 %v1202
  %1449 = vmatmul.mubr.bf16.gmra.mrb[0].mxu0 %v1201
  %v1450 = vpop.f32.mrb[0].mxu0
  %v1451 = vadd.f32 %v1254, %v1450
  %v1452 = vpop.f32.mrb[0].mxu0
  %v1453 = vpop.f32.mrb[0].mxu0
  %v1454 = vadd.f32 %v1254, %v1453
  %v1455 = vpop.f32.mrb[0].mxu0
  %1456 = vmatprep.mubr.bf16.mxu0 %v1204
  %1457 = vmatmul.mubr.bf16.gmra.mrb[0].mxu0 %v1203
  %v1458 = vpop.f32.mrb[0].mxu0
  %v1459 = vadd.f32 %v1254, %v1458
  %v1460 = vpop.f32.mrb[0].mxu0
  %v1461 = vpop.f32.mrb[0].mxu0
  %v1462 = vadd.f32 %v1254, %v1461
  %v1463 = vpop.f32.mrb[0].mxu0
  %1464 = vmatprep.mubr.bf16.mxu0 %v1206
  %1465 = vmatmul.mubr.bf16.gmra.mrb[0].mxu0 %v1205
  %v1466 = vpop.f32.mrb[0].mxu0
  %v1467 = vadd.f32 %v1254, %v1466
  %v1468 = vpop.f32.mrb[0].mxu0
  %v1469 = vpop.f32.mrb[0].mxu0
  %v1470 = vadd.f32 %v1254, %v1469
  %v1471 = vpop.f32.mrb[0].mxu0
  %1472 = vmatprep.mubr.bf16.mxu0 %v1208
  %1473 = vmatmul.mubr.bf16.gmra.mrb[0].mxu0 %v1207
  %v1474 = vpop.f32.mrb[0].mxu0
  %v1475 = vadd.f32 %v1254, %v1474
  %v1476 = vpop.f32.mrb[0].mxu0
  %v1477 = vpop.f32.mrb[0].mxu0
  %v1478 = vadd.f32 %v1254, %v1477
  %v1479 = vpop.f32.mrb[0].mxu0
  %1480 = vmatprep.mubr.bf16.mxu0 %v1210
  %1481 = vmatmul.mubr.bf16.gmra.mrb[0].mxu0 %v1209
  %v1482 = vpop.f32.mrb[0].mxu0
  %v1483 = vadd.f32 %v1254, %v1482
  %v1484 = vpop.f32.mrb[0].mxu0
  %v1485 = vpop.f32.mrb[0].mxu0
  %v1486 = vadd.f32 %v1254, %v1485
  %v1487 = vpop.f32.mrb[0].mxu0
  %1488 = vmatprep.mubr.bf16.mxu0 %v1212
  %1489 = vmatmul.mubr.bf16.gmra.mrb[0].mxu0 %v1211
  %v1490 = vpop.f32.mrb[0].mxu0
  %v1491 = vadd.f32 %v1254, %v1490
  %v1492 = vpop.f32.mrb[0].mxu0
  %v1493 = vpop.f32.mrb[0].mxu0
  %v1494 = vadd.f32 %v1254, %v1493
  %v1495 = vpop.f32.mrb[0].mxu0
  %1496 = vmatprep.mubr.bf16.mxu0 %v1214
  %1497 = vmatmul.mubr.bf16.gmra.mrb[0].mxu0 %v1213
  %v1498 = vpop.f32.mrb[0].mxu0
  %v1499 = vadd.f32 %v1254, %v1498
  %v1500 = vpop.f32.mrb[0].mxu0
  %v1501 = vpop.f32.mrb[0].mxu0
  %v1502 = vadd.f32 %v1254, %v1501
  %v1503 = vpop.f32.mrb[0].mxu0
  %1504 = vmatprep.mubr.bf16.mxu0 %v1216
  %1505 = vmatmul.mubr.bf16.gmra.mrb[0].mxu0 %v1215
  %v1506 = vpop.f32.mrb[0].mxu0
  %v1507 = vadd.f32 %v1254, %v1506
  %v1508 = vpop.f32.mrb[0].mxu0
  %v1509 = vpop.f32.mrb[0].mxu0
  %v1510 = vadd.f32 %v1254, %v1509
  %v1511 = vpop.f32.mrb[0].mxu0
  %1512 = vdwg.mxu0
  %v1513 = vsub.f32 0.0, %v1387
  %v1514 = vsub.f32 0.0, %v1390
  %v1515 = vsub.f32 0.0, %v1395
  %v1516 = vsub.f32 0.0, %v1398
  %v1517 = vsub.f32 0.0, %v1403
  %v1518 = vsub.f32 0.0, %v1406
  %v1519 = vsub.f32 0.0, %v1411
  %v1520 = vsub.f32 0.0, %v1414
  %v1521 = vsub.f32 0.0, %v1419
  %v1522 = vsub.f32 0.0, %v1422
  %v1523 = vsub.f32 0.0, %v1427
  %v1524 = vsub.f32 0.0, %v1430
  %v1525 = vsub.f32 0.0, %v1435
  %v1526 = vsub.f32 0.0, %v1438
  %v1527 = vsub.f32 0.0, %v1443
  %v1528 = vsub.f32 0.0, %v1446
  %v1529 = vsub.f32 0.0, %v1451
  %v1530 = vsub.f32 0.0, %v1454
  %v1531 = vsub.f32 0.0, %v1459
  %v1532 = vsub.f32 0.0, %v1462
  %v1533 = vsub.f32 0.0, %v1467
  %v1534 = vsub.f32 0.0, %v1470
  %v1535 = vsub.f32 0.0, %v1475
  %v1536 = vsub.f32 0.0, %v1478
  %v1537 = vsub.f32 0.0, %v1483
  %v1538 = vsub.f32 0.0, %v1486
  %v1539 = vsub.f32 0.0, %v1491
  %v1540 = vsub.f32 0.0, %v1494
  %v1541 = vsub.f32 0.0, %v1499
  %v1542 = vsub.f32 0.0, %v1502
  %v1543 = vsub.f32 0.0, %v1507
  %v1544 = vsub.f32 0.0, %v1510
  %v1545 = vmul.f32 %v1513, 1.442695
  %v1546 = vpow.pop %v1545
  %v1547 = vmul.f32 %v1514, 1.442695
  %v1548 = vpow.pop %v1547
  %v1549 = vmul.f32 %v1515, 1.442695
  %v1550 = vpow.pop %v1549
  %v1551 = vmul.f32 %v1516, 1.442695
  %v1552 = vpow.pop %v1551
  %v1553 = vmul.f32 %v1517, 1.442695
  %v1554 = vpow.pop %v1553
  %v1555 = vmul.f32 %v1518, 1.442695
  %v1556 = vpow.pop %v1555
  %v1557 = vmul.f32 %v1519, 1.442695
  %v1558 = vpow.pop %v1557
  %v1559 = vmul.f32 %v1520, 1.442695
  %v1560 = vpow.pop %v1559
  %v1561 = vmul.f32 %v1521, 1.442695
  %v1562 = vpow.pop %v1561
  %v1563 = vmul.f32 %v1522, 1.442695
  %v1564 = vpow.pop %v1563
  %v1565 = vmul.f32 %v1523, 1.442695
  %v1566 = vpow.pop %v1565
  %v1567 = vmul.f32 %v1524, 1.442695
  %v1568 = vpow.pop %v1567
  %v1569 = vmul.f32 %v1525, 1.442695
  %v1570 = vpow.pop %v1569
  %v1571 = vmul.f32 %v1526, 1.442695
  %v1572 = vpow.pop %v1571
  %v1573 = vmul.f32 %v1527, 1.442695
  %v1574 = vpow.pop %v1573
  %v1575 = vmul.f32 %v1528, 1.442695
  %v1576 = vpow.pop %v1575
  %v1577 = vmul.f32 %v1529, 1.442695
  %v1578 = vpow.pop %v1577
  %v1579 = vmul.f32 %v1530, 1.442695
  %v1580 = vpow.pop %v1579
  %v1581 = vmul.f32 %v1531, 1.442695
  %v1582 = vpow.pop %v1581
  %v1583 = vmul.f32 %v1532, 1.442695
  %v1584 = vpow.pop %v1583
  %v1585 = vmul.f32 %v1533, 1.442695
  %v1586 = vpow.pop %v1585
  %v1587 = vmul.f32 %v1534, 1.442695
  %v1588 = vpow.pop %v1587
  %v1589 = vmul.f32 %v1535, 1.442695
  %v1590 = vpow.pop %v1589
  %v1591 = vmul.f32 %v1536, 1.442695
  %v1592 = vpow.pop %v1591
  %v1593 = vmul.f32 %v1537, 1.442695
  %v1594 = vpow.pop %v1593
  %v1595 = vmul.f32 %v1538, 1.442695
  %v1596 = vpow.pop %v1595
  %v1597 = vmul.f32 %v1539, 1.442695
  %v1598 = vpow.pop %v1597
  %v1599 = vmul.f32 %v1540, 1.442695
  %v1600 = vpow.pop %v1599
  %v1601 = vmul.f32 %v1541, 1.442695
  %v1602 = vpow.pop %v1601
  %v1603 = vmul.f32 %v1542, 1.442695
  %v1604 = vpow.pop %v1603
  %v1605 = vmul.f32 %v1543, 1.442695
  %v1606 = vpow.pop %v1605
  %v1607 = vmul.f32 %v1544, 1.442695
  %v1608 = vpow.pop %v1607
  %v1609 = vadd.f32 %v1546, 1.0
  %v1610 = vadd.f32 %v1548, 1.0
  %v1611 = vadd.f32 %v1550, 1.0
  %v1612 = vadd.f32 %v1552, 1.0
  %v1613 = vadd.f32 %v1554, 1.0
  %v1614 = vadd.f32 %v1556, 1.0
  %v1615 = vadd.f32 %v1558, 1.0
  %v1616 = vadd.f32 %v1560, 1.0
  %v1617 = vadd.f32 %v1562, 1.0
  %v1618 = vadd.f32 %v1564, 1.0
  %v1619 = vadd.f32 %v1566, 1.0
  %v1620 = vadd.f32 %v1568, 1.0
  %v1621 = vadd.f32 %v1570, 1.0
  %v1622 = vadd.f32 %v1572, 1.0
  %v1623 = vadd.f32 %v1574, 1.0
  %v1624 = vadd.f32 %v1576, 1.0
  %v1625 = vadd.f32 %v1578, 1.0
  %v1626 = vadd.f32 %v1580, 1.0
  %v1627 = vadd.f32 %v1582, 1.0
  %v1628 = vadd.f32 %v1584, 1.0
  %v1629 = vadd.f32 %v1586, 1.0
  %v1630 = vadd.f32 %v1588, 1.0
  %v1631 = vadd.f32 %v1590, 1.0
  %v1632 = vadd.f32 %v1592, 1.0
  %v1633 = vadd.f32 %v1594, 1.0
  %v1634 = vadd.f32 %v1596, 1.0
  %v1635 = vadd.f32 %v1598, 1.0
  %v1636 = vadd.f32 %v1600, 1.0
  %v1637 = vadd.f32 %v1602, 1.0
  %v1638 = vadd.f32 %v1604, 1.0
  %v1639 = vadd.f32 %v1606, 1.0
  %v1640 = vadd.f32 %v1608, 1.0
  %v1641 = vrcp.pop %v1609
  %v1642 = vrcp.pop %v1610
  %v1643 = vrcp.pop %v1611
  %v1644 = vrcp.pop %v1612
  %v1645 = vrcp.pop %v1613
  %v1646 = vrcp.pop %v1614
  %v1647 = vrcp.pop %v1615
  %v1648 = vrcp.pop %v1616
  %v1649 = vrcp.pop %v1617
  %v1650 = vrcp.pop %v1618
  %v1651 = vrcp.pop %v1619
  %v1652 = vrcp.pop %v1620
  %v1653 = vrcp.pop %v1621
  %v1654 = vrcp.pop %v1622
  %v1655 = vrcp.pop %v1623
  %v1656 = vrcp.pop %v1624
  %v1657 = vrcp.pop %v1625
  %v1658 = vrcp.pop %v1626
  %v1659 = vrcp.pop %v1627
  %v1660 = vrcp.pop %v1628
  %v1661 = vrcp.pop %v1629
  %v1662 = vrcp.pop %v1630
  %v1663 = vrcp.pop %v1631
  %v1664 = vrcp.pop %v1632
  %v1665 = vrcp.pop %v1633
  %v1666 = vrcp.pop %v1634
  %v1667 = vrcp.pop %v1635
  %v1668 = vrcp.pop %v1636
  %v1669 = vrcp.pop %v1637
  %v1670 = vrcp.pop %v1638
  %v1671 = vrcp.pop %v1639
  %v1672 = vrcp.pop %v1640
  %v1673 = vld [vmem:[%s7] sm:$0xff]
  %v1674 = vld [vmem:[%s7 + $0x8] sm:$0xff]
  %v1675 = vld [vmem:[%s7 + $0x10] sm:$0xff]
  %v1676 = vld [vmem:[%s7 + $0x18] sm:$0xff]
  %v1677 = vld [vmem:[%s7 + $0x20] sm:$0xff]
  %v1678 = vld [vmem:[%s7 + $0x28] sm:$0xff]
  %v1679 = vld [vmem:[%s7 + $0x30] sm:$0xff]
  %v1680 = vld [vmem:[%s7 + $0x38] sm:$0xff]
  %v1681 = vld [vmem:[%s7 + $0x40] sm:$0xff]
  %v1682 = vld [vmem:[%s7 + $0x48] sm:$0xff]
  %v1683 = vld [vmem:[%s7 + $0x50] sm:$0xff]
  %v1684 = vld [vmem:[%s7 + $0x58] sm:$0xff]
  %v1685 = vld [vmem:[%s7 + $0x60] sm:$0xff]
  %v1686 = vld [vmem:[%s7 + $0x68] sm:$0xff]
  %v1687 = vld [vmem:[%s7 + $0x70] sm:$0xff]
  %v1688 = vld [vmem:[%s7 + $0x78] sm:$0xff]
  %v1689 = vld [vmem:[%s7 + $0x80] sm:$0xff]
  %v1690 = vld [vmem:[%s7 + $0x88] sm:$0xff]
  %v1691 = vld [vmem:[%s7 + $0x90] sm:$0xff]
  %v1692 = vld [vmem:[%s7 + $0x98] sm:$0xff]
  %v1693 = vld [vmem:[%s7 + $0xa0] sm:$0xff]
  %v1694 = vld [vmem:[%s7 + $0xa8] sm:$0xff]
  %v1695 = vld [vmem:[%s7 + $0xb0] sm:$0xff]
  %v1696 = vld [vmem:[%s7 + $0xb8] sm:$0xff]
  %v1697 = vld [vmem:[%s7 + $0xc0] sm:$0xff]
  %v1698 = vld [vmem:[%s7 + $0xc8] sm:$0xff]
  %v1699 = vld [vmem:[%s7 + $0xd0] sm:$0xff]
  %v1700 = vld [vmem:[%s7 + $0xd8] sm:$0xff]
  %vm1701 = vcmask 916480
  %v1703 = vsel %vm1701, %v1641, 0
  %v1706 = vsel %vm1701, %v1642, 0
  %v1709 = vsel %vm1701, %v1643, 0
  %v1712 = vsel %vm1701, %v1644, 0
  %v1715 = vsel %vm1701, %v1645, 0
  %v1718 = vsel %vm1701, %v1646, 0
  %v1721 = vsel %vm1701, %v1647, 0
  %v1724 = vsel %vm1701, %v1648, 0
  %v1727 = vsel %vm1701, %v1649, 0
  %v1730 = vsel %vm1701, %v1650, 0
  %v1733 = vsel %vm1701, %v1651, 0
  %v1736 = vsel %vm1701, %v1652, 0
  %v1739 = vsel %vm1701, %v1653, 0
  %v1742 = vsel %vm1701, %v1654, 0
  %v1745 = vsel %vm1701, %v1655, 0
  %v1748 = vsel %vm1701, %v1656, 0
  %v1751 = vsel %vm1701, %v1657, 0
  %v1754 = vsel %vm1701, %v1658, 0
  %v1757 = vsel %vm1701, %v1659, 0
  %v1760 = vsel %vm1701, %v1660, 0
  %v1763 = vsel %vm1701, %v1661, 0
  %v1766 = vsel %vm1701, %v1662, 0
  %v1769 = vsel %vm1701, %v1663, 0
  %v1772 = vsel %vm1701, %v1664, 0
  %v1775 = vsel %vm1701, %v1665, 0
  %v1778 = vsel %vm1701, %v1666, 0
  %v1781 = vsel %vm1701, %v1667, 0
  %v1784 = vsel %vm1701, %v1668, 0
  %v1787 = vsel %vm1701, %v1669, 0
  %v1790 = vsel %vm1701, %v1670, 0
  %v1793 = vsel %vm1701, %v1671, 0
  %v1796 = vsel %vm1701, %v1672, 0
  %1798 = vmatprep.subr.mxu0 %v1674
  %1799 = vmatpush1.msra.mxu0 %v1673
  %1800 = vmatprep.subr.mxu0 %v1676
  %1801 = vmatpush1.msra.mxu0 %v1675
  %1802 = vmatprep.subr.mxu0 %v1678
  %1803 = vmatpush1.msra.mxu0 %v1677
  %1804 = vmatprep.subr.mxu0 %v1680
  %1805 = vmatpush1.msra.mxu0 %v1679
  %1806 = vmatprep.subr.mxu0 %v1682
  %1807 = vmatpush1.msra.mxu0 %v1681
  %1808 = vmatprep.subr.mxu0 %v1684
  %1809 = vmatpush1.msra.mxu0 %v1683
  %1810 = vmatprep.subr.mxu0 %v1686
  %1811 = vmatpush1.msra.mxu0 %v1685
  %1812 = vmatprep.subr.mxu0 %v1688
  %1813 = vmatpush1.msra.mxu0 %v1687
  %1814 = vmatprep.subr.mxu0 %v1690
  %1815 = vmatpush1.msra.mxu0 %v1689
  %1816 = vmatprep.subr.mxu0 %v1692
  %1817 = vmatpush1.msra.mxu0 %v1691
  %1818 = vmatprep.subr.mxu0 %v1694
  %1819 = vmatpush1.msra.mxu0 %v1693
  %1820 = vmatprep.subr.mxu0 %v1696
  %1821 = vmatpush1.msra.mxu0 %v1695
  %1822 = vmatprep.subr.mxu0 %v1698
  %1823 = vmatpush1.msra.mxu0 %v1697
  %1824 = vmatprep.subr.mxu0 %v1700
  %1825 = vmatpush1.msra.mxu0 %v1699
  %1826 = vmatprep.subr.mxu0 0.0
  %1827 = vmatpush1.msra.mxu0 0.0
  %1828 = vmatprep.subr.mxu0 0.0
  %1829 = vmatpush1.msra.mxu0 0.0
  %1830 = vmatprep.subr.mxu0 0.0
  %1831 = vmatpush1.msra.mxu0 0.0
  %1832 = vmatprep.subr.mxu0 0.0
  %1833 = vmatpush1.msra.mxu0 0.0
  %1834 = vmatprep.subr.mxu0 0.0
  %1835 = vmatpush1.msra.mxu0 0.0
  %1836 = vmatprep.subr.mxu0 0.0
  %1837 = vmatpush1.msra.mxu0 0.0
  %1838 = vmatprep.subr.mxu0 0.0
  %1839 = vmatpush1.msra.mxu0 0.0
  %1840 = vmatprep.subr.mxu0 0.0
  %1841 = vmatpush1.msra.mxu0 0.0
  %1842 = vmatprep.subr.mxu0 0.0
  %1843 = vmatpush1.msra.mxu0 0.0
  %1844 = vmatprep.subr.mxu0 0.0
  %1845 = vmatpush1.msra.mxu0 0.0
  %1846 = vmatprep.subr.mxu0 0.0
  %1847 = vmatpush1.msra.mxu0 0.0
  %1848 = vmatprep.subr.mxu0 0.0
  %1849 = vmatpush1.msra.mxu0 0.0
  %1850 = vmatprep.subr.mxu0 0.0
  %1851 = vmatpush1.msra.mxu0 0.0
  %1852 = vmatprep.subr.mxu0 0.0
  %1853 = vmatpush1.msra.mxu0 0.0
  %1854 = vmatprep.subr.mxu0 0.0
  %1855 = vmatpush1.msra.mxu0 0.0
  %1856 = vmatprep.subr.mxu0 0.0
  %1857 = vmatpush1.msra.mxu0 0.0
  %1858 = vmatprep.subr.mxu0 0.0
  %1859 = vmatpush1.msra.mxu0 0.0
  %1860 = vmatprep.subr.mxu0 0.0
  %1861 = vmatpush1.msra.mxu0 0.0
  %1862 = vmatprep.mubr.f32.mxu0 0.0
  %1863 = vmatmul.mubr.f32.gmra.mrb[0].mxu0 %v1703
  %v1864 = vpop.f32.mrb[0].mxu0
  %v1865 = vadd.f32 0.0, %v1864
  %v1866 = vpop.f32.mrb[0].mxu0
  %v1867 = vadd.f32 0.0, %v1866
  %1868 = vmatprep.mubr.f32.mxu0 0.0
  %1869 = vmatmul.mubr.f32.gmra.mrb[0].mxu0 %v1706
  %v1870 = vpop.f32.mrb[0].mxu0
  %v1871 = vadd.f32 0.0, %v1870
  %v1872 = vpop.f32.mrb[0].mxu0
  %v1873 = vadd.f32 0.0, %v1872
  %1874 = vmatprep.mubr.f32.mxu0 0.0
  %1875 = vmatmul.mubr.f32.gmra.mrb[0].mxu0 %v1709
  %v1876 = vpop.f32.mrb[0].mxu0
  %v1877 = vadd.f32 0.0, %v1876
  %v1878 = vpop.f32.mrb[0].mxu0
  %v1879 = vadd.f32 0.0, %v1878
  %1880 = vmatprep.mubr.f32.mxu0 0.0
  %1881 = vmatmul.mubr.f32.gmra.mrb[0].mxu0 %v1712
  %v1882 = vpop.f32.mrb[0].mxu0
  %v1883 = vadd.f32 0.0, %v1882
  %v1884 = vpop.f32.mrb[0].mxu0
  %v1885 = vadd.f32 0.0, %v1884
  %1886 = vmatprep.mubr.f32.mxu0 0.0
  %1887 = vmatmul.mubr.f32.gmra.mrb[0].mxu0 %v1715
  %v1888 = vpop.f32.mrb[0].mxu0
  %v1889 = vadd.f32 0.0, %v1888
  %v1890 = vpop.f32.mrb[0].mxu0
  %v1891 = vadd.f32 0.0, %v1890
  %1892 = vmatprep.mubr.f32.mxu0 0.0
  %1893 = vmatmul.mubr.f32.gmra.mrb[0].mxu0 %v1718
  %v1894 = vpop.f32.mrb[0].mxu0
  %v1895 = vadd.f32 0.0, %v1894
  %v1896 = vpop.f32.mrb[0].mxu0
  %v1897 = vadd.f32 0.0, %v1896
  %1898 = vmatprep.mubr.f32.mxu0 0.0
  %1899 = vmatmul.mubr.f32.gmra.mrb[0].mxu0 %v1721
  %v1900 = vpop.f32.mrb[0].mxu0
  %v1901 = vadd.f32 0.0, %v1900
  %v1902 = vpop.f32.mrb[0].mxu0
  %v1903 = vadd.f32 0.0, %v1902
  %1904 = vmatprep.mubr.f32.mxu0 0.0
  %1905 = vmatmul.mubr.f32.gmra.mrb[0].mxu0 %v1724
  %v1906 = vpop.f32.mrb[0].mxu0
  %v1907 = vadd.f32 0.0, %v1906
  %v1908 = vpop.f32.mrb[0].mxu0
  %v1909 = vadd.f32 0.0, %v1908
  %1910 = vmatprep.mubr.f32.mxu0 0.0
  %1911 = vmatmul.mubr.f32.gmra.mrb[0].mxu0 %v1727
  %v1912 = vpop.f32.mrb[0].mxu0
  %v1913 = vadd.f32 0.0, %v1912
  %v1914 = vpop.f32.mrb[0].mxu0
  %v1915 = vadd.f32 0.0, %v1914
  %1916 = vmatprep.mubr.f32.mxu0 0.0
  %1917 = vmatmul.mubr.f32.gmra.mrb[0].mxu0 %v1730
  %v1918 = vpop.f32.mrb[0].mxu0
  %v1919 = vadd.f32 0.0, %v1918
  %v1920 = vpop.f32.mrb[0].mxu0
  %v1921 = vadd.f32 0.0, %v1920
  %1922 = vmatprep.mubr.f32.mxu0 0.0
  %1923 = vmatmul.mubr.f32.gmra.mrb[0].mxu0 %v1733
  %v1924 = vpop.f32.mrb[0].mxu0
  %v1925 = vadd.f32 0.0, %v1924
  %v1926 = vpop.f32.mrb[0].mxu0
  %v1927 = vadd.f32 0.0, %v1926
  %1928 = vmatprep.mubr.f32.mxu0 0.0
  %1929 = vmatmul.mubr.f32.gmra.mrb[0].mxu0 %v1736
  %v1930 = vpop.f32.mrb[0].mxu0
  %v1931 = vadd.f32 0.0, %v1930
  %v1932 = vpop.f32.mrb[0].mxu0
  %v1933 = vadd.f32 0.0, %v1932
  %1934 = vmatprep.mubr.f32.mxu0 0.0
  %1935 = vmatmul.mubr.f32.gmra.mrb[0].mxu0 %v1739
  %v1936 = vpop.f32.mrb[0].mxu0
  %v1937 = vadd.f32 0.0, %v1936
  %v1938 = vpop.f32.mrb[0].mxu0
  %v1939 = vadd.f32 0.0, %v1938
  %1940 = vmatprep.mubr.f32.mxu0 0.0
  %1941 = vmatmul.mubr.f32.gmra.mrb[0].mxu0 %v1742
  %v1942 = vpop.f32.mrb[0].mxu0
  %v1943 = vadd.f32 0.0, %v1942
  %v1944 = vpop.f32.mrb[0].mxu0
  %v1945 = vadd.f32 0.0, %v1944
  %1946 = vmatprep.mubr.f32.mxu0 0.0
  %1947 = vmatmul.mubr.f32.gmra.mrb[0].mxu0 %v1745
  %v1948 = vpop.f32.mrb[0].mxu0
  %v1949 = vadd.f32 0.0, %v1948
  %v1950 = vpop.f32.mrb[0].mxu0
  %v1951 = vadd.f32 0.0, %v1950
  %1952 = vmatprep.mubr.f32.mxu0 0.0
  %1953 = vmatmul.mubr.f32.gmra.mrb[0].mxu0 %v1748
  %v1954 = vpop.f32.mrb[0].mxu0
  %v1955 = vadd.f32 0.0, %v1954
  %v1956 = vpop.f32.mrb[0].mxu0
  %v1957 = vadd.f32 0.0, %v1956
  %1958 = vmatprep.mubr.f32.mxu0 0.0
  %1959 = vmatmul.mubr.f32.gmra.mrb[0].mxu0 %v1751
  %v1960 = vpop.f32.mrb[0].mxu0
  %v1961 = vadd.f32 0.0, %v1960
  %v1962 = vpop.f32.mrb[0].mxu0
  %v1963 = vadd.f32 0.0, %v1962
  %1964 = vmatprep.mubr.f32.mxu0 0.0
  %1965 = vmatmul.mubr.f32.gmra.mrb[0].mxu0 %v1754
  %v1966 = vpop.f32.mrb[0].mxu0
  %v1967 = vadd.f32 0.0, %v1966
  %v1968 = vpop.f32.mrb[0].mxu0
  %v1969 = vadd.f32 0.0, %v1968
  %1970 = vmatprep.mubr.f32.mxu0 0.0
  %1971 = vmatmul.mubr.f32.gmra.mrb[0].mxu0 %v1757
  %v1972 = vpop.f32.mrb[0].mxu0
  %v1973 = vadd.f32 0.0, %v1972
  %v1974 = vpop.f32.mrb[0].mxu0
  %v1975 = vadd.f32 0.0, %v1974
  %1976 = vmatprep.mubr.f32.mxu0 0.0
  %1977 = vmatmul.mubr.f32.gmra.mrb[0].mxu0 %v1760
  %v1978 = vpop.f32.mrb[0].mxu0
  %v1979 = vadd.f32 0.0, %v1978
  %v1980 = vpop.f32.mrb[0].mxu0
  %v1981 = vadd.f32 0.0, %v1980
  %1982 = vmatprep.mubr.f32.mxu0 0.0
  %1983 = vmatmul.mubr.f32.gmra.mrb[0].mxu0 %v1763
  %v1984 = vpop.f32.mrb[0].mxu0
  %v1985 = vadd.f32 0.0, %v1984
  %v1986 = vpop.f32.mrb[0].mxu0
  %v1987 = vadd.f32 0.0, %v1986
  %1988 = vmatprep.mubr.f32.mxu0 0.0
  %1989 = vmatmul.mubr.f32.gmra.mrb[0].mxu0 %v1766
  %v1990 = vpop.f32.mrb[0].mxu0
  %v1991 = vadd.f32 0.0, %v1990
  %v1992 = vpop.f32.mrb[0].mxu0
  %v1993 = vadd.f32 0.0, %v1992
  %1994 = vmatprep.mubr.f32.mxu0 0.0
  %1995 = vmatmul.mubr.f32.gmra.mrb[0].mxu0 %v1769
  %v1996 = vpop.f32.mrb[0].mxu0
  %v1997 = vadd.f32 0.0, %v1996
  %v1998 = vpop.f32.mrb[0].mxu0
  %v1999 = vadd.f32 0.0, %v1998
  %2000 = vmatprep.mubr.f32.mxu0 0.0
  %2001 = vmatmul.mubr.f32.gmra.mrb[0].mxu0 %v1772
  %v2002 = vpop.f32.mrb[0].mxu0
  %v2003 = vadd.f32 0.0, %v2002
  %v2004 = vpop.f32.mrb[0].mxu0
  %v2005 = vadd.f32 0.0, %v2004
  %2006 = vmatprep.mubr.f32.mxu0 0.0
  %2007 = vmatmul.mubr.f32.gmra.mrb[0].mxu0 %v1775
  %v2008 = vpop.f32.mrb[0].mxu0
  %v2009 = vadd.f32 0.0, %v2008
  %v2010 = vpop.f32.mrb[0].mxu0
  %v2011 = vadd.f32 0.0, %v2010
  %2012 = vmatprep.mubr.f32.mxu0 0.0
  %2013 = vmatmul.mubr.f32.gmra.mrb[0].mxu0 %v1778
  %v2014 = vpop.f32.mrb[0].mxu0
  %v2015 = vadd.f32 0.0, %v2014
  %v2016 = vpop.f32.mrb[0].mxu0
  %v2017 = vadd.f32 0.0, %v2016
  %2018 = vmatprep.mubr.f32.mxu0 0.0
  %2019 = vmatmul.mubr.f32.gmra.mrb[0].mxu0 %v1781
  %v2020 = vpop.f32.mrb[0].mxu0
  %v2021 = vadd.f32 0.0, %v2020
  %v2022 = vpop.f32.mrb[0].mxu0
  %v2023 = vadd.f32 0.0, %v2022
  %2024 = vmatprep.mubr.f32.mxu0 0.0
  %2025 = vmatmul.mubr.f32.gmra.mrb[0].mxu0 %v1784
  %v2026 = vpop.f32.mrb[0].mxu0
  %v2027 = vadd.f32 0.0, %v2026
  %v2028 = vpop.f32.mrb[0].mxu0
  %v2029 = vadd.f32 0.0, %v2028
  %2030 = vmatprep.mubr.f32.mxu0 0.0
  %2031 = vmatmul.mubr.f32.gmra.mrb[0].mxu0 %v1787
  %v2032 = vpop.f32.mrb[0].mxu0
  %v2033 = vadd.f32 0.0, %v2032
  %v2034 = vpop.f32.mrb[0].mxu0
  %v2035 = vadd.f32 0.0, %v2034
  %2036 = vmatprep.mubr.f32.mxu0 0.0
  %2037 = vmatmul.mubr.f32.gmra.mrb[0].mxu0 %v1790
  %v2038 = vpop.f32.mrb[0].mxu0
  %v2039 = vadd.f32 0.0, %v2038
  %v2040 = vpop.f32.mrb[0].mxu0
  %v2041 = vadd.f32 0.0, %v2040
  %2042 = vmatprep.mubr.f32.mxu0 0.0
  %2043 = vmatmul.mubr.f32.gmra.mrb[0].mxu0 %v1793
  %v2044 = vpop.f32.mrb[0].mxu0
  %v2045 = vadd.f32 0.0, %v2044
  %v2046 = vpop.f32.mrb[0].mxu0
  %v2047 = vadd.f32 0.0, %v2046
  %2048 = vmatprep.mubr.f32.mxu0 0.0
  %2049 = vmatmul.mubr.f32.gmra.mrb[0].mxu0 %v1796
  %v2050 = vpop.f32.mrb[0].mxu0
  %v2051 = vadd.f32 0.0, %v2050
  %v2052 = vpop.f32.mrb[0].mxu0
  %v2053 = vadd.f32 0.0, %v2052
  %2054 = vdwg.mxu0
  %2055 = vst [vmem:[%s8] sm:$0xff] %v1865
  %vm2056 = vcmask 703488
  %2057 = vst.msk [vmem:[%s8 + $0x8] sm:$0xff] %vm2056, %v1867
  %2058 = vst [vmem:[%s8 + $0x10] sm:$0xff] %v1871
  %2059 = vst.msk [vmem:[%s8 + $0x18] sm:$0xff] %vm2056, %v1873
  %2060 = vst [vmem:[%s8 + $0x20] sm:$0xff] %v1877
  %2061 = vst.msk [vmem:[%s8 + $0x28] sm:$0xff] %vm2056, %v1879
  %2062 = vst [vmem:[%s8 + $0x30] sm:$0xff] %v1883
  %2063 = vst.msk [vmem:[%s8 + $0x38] sm:$0xff] %vm2056, %v1885
  %2064 = vst [vmem:[%s8 + $0x40] sm:$0xff] %v1889
  %2065 = vst.msk [vmem:[%s8 + $0x48] sm:$0xff] %vm2056, %v1891
  %2066 = vst [vmem:[%s8 + $0x50] sm:$0xff] %v1895
  %2067 = vst.msk [vmem:[%s8 + $0x58] sm:$0xff] %vm2056, %v1897
  %2068 = vst [vmem:[%s8 + $0x60] sm:$0xff] %v1901
  %2069 = vst.msk [vmem:[%s8 + $0x68] sm:$0xff] %vm2056, %v1903
  %2070 = vst [vmem:[%s8 + $0x70] sm:$0xff] %v1907
  %2071 = vst.msk [vmem:[%s8 + $0x78] sm:$0xff] %vm2056, %v1909
  %2072 = vst [vmem:[%s8 + $0x80] sm:$0xff] %v1913
  %2073 = vst.msk [vmem:[%s8 + $0x88] sm:$0xff] %vm2056, %v1915
  %2074 = vst [vmem:[%s8 + $0x90] sm:$0xff] %v1919
  %2075 = vst.msk [vmem:[%s8 + $0x98] sm:$0xff] %vm2056, %v1921
  %2076 = vst [vmem:[%s8 + $0xa0] sm:$0xff] %v1925
  %2077 = vst.msk [vmem:[%s8 + $0xa8] sm:$0xff] %vm2056, %v1927
  %2078 = vst [vmem:[%s8 + $0xb0] sm:$0xff] %v1931
  %2079 = vst.msk [vmem:[%s8 + $0xb8] sm:$0xff] %vm2056, %v1933
  %2080 = vst [vmem:[%s8 + $0xc0] sm:$0xff] %v1937
  %2081 = vst.msk [vmem:[%s8 + $0xc8] sm:$0xff] %vm2056, %v1939
  %2082 = vst [vmem:[%s8 + $0xd0] sm:$0xff] %v1943
  %2083 = vst.msk [vmem:[%s8 + $0xd8] sm:$0xff] %vm2056, %v1945
  %2084 = vst [vmem:[%s8 + $0xe0] sm:$0xff] %v1949
  %2085 = vst.msk [vmem:[%s8 + $0xe8] sm:$0xff] %vm2056, %v1951
  %2086 = vst [vmem:[%s8 + $0xf0] sm:$0xff] %v1955
  %2087 = vst.msk [vmem:[%s8 + $0xf8] sm:$0xff] %vm2056, %v1957
  %2088 = vst [vmem:[%s8 + $0x100] sm:$0xff] %v1961
  %2089 = vst.msk [vmem:[%s8 + $0x108] sm:$0xff] %vm2056, %v1963
  %2090 = vst [vmem:[%s8 + $0x110] sm:$0xff] %v1967
  %2091 = vst.msk [vmem:[%s8 + $0x118] sm:$0xff] %vm2056, %v1969
  %2092 = vst [vmem:[%s8 + $0x120] sm:$0xff] %v1973
  %2093 = vst.msk [vmem:[%s8 + $0x128] sm:$0xff] %vm2056, %v1975
  %2094 = vst [vmem:[%s8 + $0x130] sm:$0xff] %v1979
  %2095 = vst.msk [vmem:[%s8 + $0x138] sm:$0xff] %vm2056, %v1981
  %2096 = vst [vmem:[%s8 + $0x140] sm:$0xff] %v1985
  %2097 = vst.msk [vmem:[%s8 + $0x148] sm:$0xff] %vm2056, %v1987
  %2098 = vst [vmem:[%s8 + $0x150] sm:$0xff] %v1991
  %2099 = vst.msk [vmem:[%s8 + $0x158] sm:$0xff] %vm2056, %v1993
  %2100 = vst [vmem:[%s8 + $0x160] sm:$0xff] %v1997
  %2101 = vst.msk [vmem:[%s8 + $0x168] sm:$0xff] %vm2056, %v1999
  %2102 = vst [vmem:[%s8 + $0x170] sm:$0xff] %v2003
  %2103 = vst.msk [vmem:[%s8 + $0x178] sm:$0xff] %vm2056, %v2005
  %2104 = vst [vmem:[%s8 + $0x180] sm:$0xff] %v2009
  %2105 = vst.msk [vmem:[%s8 + $0x188] sm:$0xff] %vm2056, %v2011
  %2106 = vst [vmem:[%s8 + $0x190] sm:$0xff] %v2015
  %2107 = vst.msk [vmem:[%s8 + $0x198] sm:$0xff] %vm2056, %v2017
  %2108 = vst [vmem:[%s8 + $0x1a0] sm:$0xff] %v2021
  %2109 = vst.msk [vmem:[%s8 + $0x1a8] sm:$0xff] %vm2056, %v2023
  %2110 = vst [vmem:[%s8 + $0x1b0] sm:$0xff] %v2027
  %2111 = vst.msk [vmem:[%s8 + $0x1b8] sm:$0xff] %vm2056, %v2029
  %2112 = vst [vmem:[%s8 + $0x1c0] sm:$0xff] %v2033
  %2113 = vst.msk [vmem:[%s8 + $0x1c8] sm:$0xff] %vm2056, %v2035
  %2114 = vst [vmem:[%s8 + $0x1d0] sm:$0xff] %v2039
  %2115 = vst.msk [vmem:[%s8 + $0x1d8] sm:$0xff] %vm2056, %v2041
  %2116 = vst [vmem:[%s8 + $0x1e0] sm:$0xff] %v2045
  %2117 = vst.msk [vmem:[%s8 + $0x1e8] sm:$0xff] %vm2056, %v2047
  %2118 = vst [vmem:[%s8 + $0x1f0] sm:$0xff] %v2051
  %2119 = vst.msk [vmem:[%s8 + $0x1f8] sm:$0xff] %vm2056, %v2053
  // Predicated region
  $region34: #{tpu_custom_call.1} parent=0 // pred_check
    _
  $region35: #{tpu_custom_call.1} parent=0 // pred_check_branch
    %2121 = sbr.rel (0) target = $region37
  $region36: #{tpu_custom_call.1} parent=0 // pred_region
    _
  $region37: #{tpu_custom_call.1} parent=0 // pred_fallthru
    _
  // Predicated region
  $region38: #{tpu_custom_call.1} parent=0 // pred_check
    _
  $region39: #{tpu_custom_call.1} parent=0 // pred_check_branch
    %2123 = sbr.rel (0) target = $region41
  $region40: #{tpu_custom_call.1} parent=0 // pred_region
    _
  $region41: #{tpu_custom_call.1} parent=0 // pred_fallthru
    _

</llo_original>
